<compile_context>
chip_gen: v7x
topology: tpu7x:2x2x1
jax: 0.10.0
libtpu: 0.0.40
codegen_flags: <defaults>
</compile_context>

<pallas_src>
import jax
import jax.numpy as jnp
from jax.experimental import pallas as pl
from jax.experimental.pallas import tpu as pltpu

HIDDEN = 768          # BERT hidden size (fixed by the nn.Linear(768, ...) heads)
N_CATEGORIES = 13
N_POLARITIES = 3
HEAD_PAD = 128        # fused head output width (13 + 3, zero-padded to one lane tile)
TN_MAX = 128          # batch rows per grid step (MXU M-fill for pooler matmul)
TCHUNK_MAX = 32       # sequence positions streamed per grid step (bf16-tile aligned)


def _round_up(x, m):
    return (x + m - 1) // m * m


def _vmem_capacity_bytes():
    """Per-core VMEM capacity; conservative v7x fallback if the query fails."""
    try:
        cap = getattr(pltpu.get_tpu_info(), "vmem_capacity_bytes", None)
        if cap:
            return int(cap)
    except Exception:
        pass
    return 64 << 20


def sentiment_kernel(h_ref, m_ref, wp_ref, bp_ref, wh_ref, bh_ref, out_ref,
                     acc_ref, den_ref):
    """Grid = (batch tiles, sequence chunks); the sequence axis is a reduction.

    h_ref  : (TN, TC, H) bf16  token-embedding chunk ("bert" hidden states)
    m_ref  : (TN, TC, 1) f32   attention-mask chunk (pre-shaped -> lane splat)
    wp_ref : (H, H)      bf16  pooler dense weight (VMEM resident)
    bp_ref : (1, H)      f32   pooler dense bias
    wh_ref : (H, 128)    bf16  fused [category | polarity | zero-pad] head weight
    bh_ref : (1, 128)    f32   fused head bias
    out_ref: (TN, 128)   f32   fused logits (lane-dense store)
    acc_ref: (TN, H)     f32   running masked sum over the sequence
    den_ref: (TN, 1)     f32   running mask count
    """
    t = pl.program_id(1)

    @pl.when(t == 0)
    def _init():
        acc_ref[...] = jnp.zeros_like(acc_ref)
        den_ref[...] = jnp.zeros_like(den_ref)

    # Masked partial sum over this sequence chunk.  Only a chunk-sized f32
    # intermediate is live (no full-tile upcast); f32 elementwise keeps v5e's
    # f32-only VPU happy and is bandwidth-neutral on v6e/v7x.
    m = m_ref[...]                                              # (TN, TC, 1)
    acc_ref[...] += jnp.sum(h_ref[...].astype(jnp.float32) * m, axis=1)
    den_ref[...] += jnp.sum(m, axis=1)                          # (TN, 1)

    @pl.when(t == pl.num_programs(1) - 1)
    def _finish():
        # Attention-masked mean; exact divide, clamped denom keeps padded rows finite.
        ctx = acc_ref[...] / jnp.maximum(den_ref[...], 1.0)     # (TN, H)

        # BERT-style pooler: dense + tanh -> pooled_output.
        pooled = jnp.tanh(
            jnp.dot(ctx.astype(jnp.bfloat16), wp_ref[...],
                    preferred_element_type=jnp.float32) + bp_ref[...])

        # Dropout(0.3) is identity in eval mode.

        # Fused classification heads: one lane-dense (TN, 128) matmul.
        out_ref[...] = (
            jnp.dot(pooled.astype(jnp.bfloat16), wh_ref[...],
                    preferred_element_type=jnp.float32) + bh_ref[...])


def sentiment_net_forward(input_ids, attention_mask, params):
    """Embedding gather + head packing in JAX, everything else in the kernel."""
    emb = params["embedding"]                                   # (VOCAB, H) bf16
    h = jnp.take(emb, input_ids, axis=0)                        # (N, T, H)  bf16
    # TODO(synk): fuse this gather into the kernel (scalar-prefetched ids +
    # manual DMA from the HBM-resident table) to cut the dominant HBM stream.
    m = attention_mask.astype(jnp.float32)[:, :, None]          # (N, T, 1)

    N, T = input_ids.shape
    tc = min(TCHUNK_MAX, _round_up(T, 16))       # bf16 sublane-tile aligned chunk
    t_pad = _round_up(T, tc)
    tn = min(TN_MAX, _round_up(N, 8))
    n_pad = _round_up(N, tn)

    if (n_pad, t_pad) != (N, T):
        h = jnp.pad(h, ((0, n_pad - N), (0, t_pad - T), (0, 0)))
        m = jnp.pad(m, ((0, n_pad - N), (0, t_pad - T), (0, 0)))   # pads: mask == 0

    # Fuse both heads into one lane-dense 768x128 matmul (sliced back in wrapper).
    n_heads = N_CATEGORIES + N_POLARITIES
    wh = jnp.concatenate([params["cat_w"], params["pol_w"]], axis=1)
    wh = jnp.pad(wh, ((0, 0), (0, HEAD_PAD - n_heads))).astype(jnp.bfloat16)
    bh = jnp.concatenate([params["cat_b"], params["pol_b"]], axis=1)
    bh = jnp.pad(bh, ((0, 0), (0, HEAD_PAD - n_heads))).astype(jnp.float32)
    wp = params["pooler_w"].astype(jnp.bfloat16)
    bp = params["pooler_b"].astype(jnp.float32)

    # VMEM budget: double-buffered streamed tiles + resident weights + chunk
    # f32 temporaries + scratch accumulators, +35% headroom, clamped under the
    # physical per-core capacity (64 MiB v7x, 128 MiB v5e/v6e).
    h_tile = tn * tc * HIDDEN * 2
    m_tile = tn * tc * 4
    o_tile = tn * HEAD_PAD * 4
    w_bytes = HIDDEN * HIDDEN * 2 + HIDDEN * 4 + HIDDEN * HEAD_PAD * 2 + HEAD_PAD * 4
    temp_bytes = tn * tc * HIDDEN * 4 + 4 * tn * HIDDEN * 4
    total = 2 * (h_tile + m_tile + o_tile + w_bytes) + temp_bytes
    cap = _vmem_capacity_bytes()
    vmem_limit = max(32 << 20, min(int(1.35 * total), int(0.9 * cap)))

    grid = (n_pad // tn, t_pad // tc)
    cost = pl.CostEstimate(
        flops=2 * n_pad * HIDDEN * (t_pad + HIDDEN + HEAD_PAD),
        transcendentals=n_pad * HIDDEN,
        bytes_accessed=(n_pad * t_pad * HIDDEN * 2 + n_pad * t_pad * 4
                        + HIDDEN * HIDDEN * 2 + HIDDEN * HEAD_PAD * 2
                        + n_pad * HEAD_PAD * 4),
    )

    logits = pl.pallas_call(
        sentiment_kernel,
        out_shape=jax.ShapeDtypeStruct((n_pad, HEAD_PAD), jnp.float32),
        grid=grid,
        in_specs=[
            pl.BlockSpec((tn, tc, HIDDEN), lambda i, t: (i, t, 0)),  # h chunk, streamed
            pl.BlockSpec((tn, tc, 1), lambda i, t: (i, t, 0)),       # mask chunk
            pl.BlockSpec((HIDDEN, HIDDEN), lambda i, t: (0, 0)),     # weights resident
            pl.BlockSpec((1, HIDDEN), lambda i, t: (0, 0)),
            pl.BlockSpec((HIDDEN, HEAD_PAD), lambda i, t: (0, 0)),
            pl.BlockSpec((1, HEAD_PAD), lambda i, t: (0, 0)),
        ],
        out_specs=pl.BlockSpec((tn, HEAD_PAD), lambda i, t: (i, 0)),
        scratch_shapes=[pltpu.VMEM((tn, HIDDEN), jnp.float32),       # masked-sum acc
                        pltpu.VMEM((tn, 1), jnp.float32)],           # mask-count acc
        compiler_params=pltpu.CompilerParams(
            dimension_semantics=("parallel", "arbitrary"),
            vmem_limit_bytes=vmem_limit),
        cost_estimate=cost,
    )(h, m, wp, bp, wh, bh)

    logits = logits[:N]
    cat_logits = logits[:, :N_CATEGORIES]
    pol_logits = logits[:, N_CATEGORIES:N_CATEGORIES + N_POLARITIES]
    return cat_logits, pol_logits


def init_params(key, vocab_size):
    ks = jax.random.split(key, 6)
    scale_h = 1.0 / jnp.sqrt(HIDDEN)
    return {
        "embedding": (jax.random.normal(ks[0], (vocab_size, HIDDEN), jnp.float32)
                      * 0.02).astype(jnp.bfloat16),
        "pooler_w": jax.random.normal(ks[1], (HIDDEN, HIDDEN), jnp.float32) * scale_h,
        "pooler_b": jnp.zeros((1, HIDDEN), jnp.float32),
        "cat_w": jax.random.normal(ks[2], (HIDDEN, N_CATEGORIES), jnp.float32) * scale_h,
        "cat_b": jax.random.normal(ks[3], (1, N_CATEGORIES), jnp.float32) * 0.01,
        "pol_w": jax.random.normal(ks[4], (HIDDEN, N_POLARITIES), jnp.float32) * scale_h,
        "pol_b": jax.random.normal(ks[5], (1, N_POLARITIES), jnp.float32) * 0.01,
    }


if __name__ == "__main__":
    key = jax.random.PRNGKey(0)
    k_params, k_ids = jax.random.split(key)

    N, T, VOCAB = 2, 8, 100
    params = init_params(k_params, VOCAB)

    input_ids = jax.random.randint(k_ids, (N, T), 0, VOCAB, dtype=jnp.int32)
    attention_mask = jnp.array(
        [[1, 1, 1, 1, 1, 1, 0, 0],
         [1, 1, 1, 1, 0, 0, 0, 0]], dtype=jnp.int32)

    fwd = jax.jit(sentiment_net_forward)
    cat_logits, pol_logits = fwd(input_ids, attention_mask, params)
    jax.block_until_ready((cat_logits, pol_logits))

    assert cat_logits.shape == (N, N_CATEGORIES)
    assert pol_logits.shape == (N, N_POLARITIES)
    assert bool(jnp.all(jnp.isfinite(cat_logits)))
    assert bool(jnp.all(jnp.isfinite(pol_logits)))
    print("KERNEL_OK")
</pallas_src>

<mosaic_0001>
module attributes {stable_mosaic.version = 11 : i64} {
  func.func @sentiment_kernel(%arg0: i32, %arg1: i32, %arg2: memref<8x16x768xbf16, #tpu.memory_space<vmem>>, %arg3: memref<8x16x1xf32, #tpu.memory_space<vmem>>, %arg4: memref<768x768xbf16, #tpu.memory_space<vmem>>, %arg5: memref<1x768xf32, #tpu.memory_space<vmem>>, %arg6: memref<768x128xbf16, #tpu.memory_space<vmem>>, %arg7: memref<1x128xf32, #tpu.memory_space<vmem>>, %arg8: memref<8x128xf32, #tpu.memory_space<vmem>>, %arg9: memref<8x768xf32, #tpu.memory_space<vmem>>, %arg10: memref<8x1xf32, #tpu.memory_space<vmem>>) attributes {dimension_semantics = [#tpu.dimension_semantics<parallel>, #tpu.dimension_semantics<arbitrary>], iteration_bounds = array<i64: 1, 1>, scalar_prefetch = 0 : i64, scratch_operands = 2 : i64, tpu.core_type = #tpu.core_type<tc>, window_params = [{transform_indices = @transform_0, window_bounds = array<i64: 8, 16, 768>}, {transform_indices = @transform_1, window_bounds = array<i64: 8, 16, 1>}, {pipeline_mode = #tpu.pipeline_mode<synchronous>, transform_indices = @transform_2, window_bounds = array<i64: 768, 768>}, {pipeline_mode = #tpu.pipeline_mode<synchronous>, transform_indices = @transform_3, window_bounds = array<i64: 1, 768>}, {pipeline_mode = #tpu.pipeline_mode<synchronous>, transform_indices = @transform_4, window_bounds = array<i64: 768, 128>}, {pipeline_mode = #tpu.pipeline_mode<synchronous>, transform_indices = @transform_5, window_bounds = array<i64: 1, 128>}, {transform_indices = @transform_6, window_bounds = array<i64: 8, 128>}]} {
    %c0_i32 = arith.constant 0 : i32
    %0 = arith.cmpi eq, %arg1, %c0_i32 : i32
    %1 = arith.extui %0 : i1 to i32
    %c0_i32_0 = arith.constant 0 : i32
    %2 = arith.cmpi ne, %1, %c0_i32_0 : i32
    scf.if %2 {
      %cst_17 = arith.constant 0.000000e+00 : f32
      %19 = vector.broadcast %cst_17 : f32 to vector<8x768xf32>
      %c0_18 = arith.constant 0 : index
      %c0_19 = arith.constant 0 : index
      %20 = vector.load %arg9[%c0_18, %c0_19] : memref<8x768xf32, #tpu.memory_space<vmem>>, vector<8x768xf32>
      tpu.vector_store %arg9[%c0_18, %c0_19], %19 {strides = array<i32>} : memref<8x768xf32, #tpu.memory_space<vmem>>, vector<8x768xf32>,
      %cst_20 = arith.constant 0.000000e+00 : f32
      %21 = vector.broadcast %cst_20 : f32 to vector<8x1xf32>
      %c0_21 = arith.constant 0 : index
      %c0_22 = arith.constant 0 : index
      %22 = vector.load %arg10[%c0_21, %c0_22] : memref<8x1xf32, #tpu.memory_space<vmem>>, vector<8x1xf32>
      tpu.vector_store %arg10[%c0_21, %c0_22], %21 {strides = array<i32>} : memref<8x1xf32, #tpu.memory_space<vmem>>, vector<8x1xf32>,
    } else {
    }
    %c0 = arith.constant 0 : index
    %c0_1 = arith.constant 0 : index
    %c0_2 = arith.constant 0 : index
    %3 = vector.load %arg3[%c0, %c0_1, %c0_2] : memref<8x16x1xf32, #tpu.memory_space<vmem>>, vector<8x16x1xf32>
    %c0_3 = arith.constant 0 : index
    %c0_4 = arith.constant 0 : index
    %4 = vector.load %arg9[%c0_3, %c0_4] : memref<8x768xf32, #tpu.memory_space<vmem>>, vector<8x768xf32>
    %c0_5 = arith.constant 0 : index
    %c0_6 = arith.constant 0 : index
    %c0_7 = arith.constant 0 : index
    %5 = vector.load %arg2[%c0_5, %c0_6, %c0_7] : memref<8x16x768xbf16, #tpu.memory_space<vmem>>, vector<8x16x768xbf16>
    %6 = arith.extf %5 : vector<8x16x768xbf16> to vector<8x16x768xf32>
    %7 = vector.broadcast %3 : vector<8x16x1xf32> to vector<8x16x768xf32>
    %8 = arith.mulf %6, %7 : vector<8x16x768xf32>
    %cst = arith.constant dense<0.000000e+00> : vector<8x768xf32>
    %9 = vector.multi_reduction <add>, %8, %cst [1] : vector<8x16x768xf32> to vector<8x768xf32>
    %10 = arith.addf %4, %9 : vector<8x768xf32>
    %c0_8 = arith.constant 0 : index
    %c0_9 = arith.constant 0 : index
    %11 = vector.load %arg9[%c0_8, %c0_9] : memref<8x768xf32, #tpu.memory_space<vmem>>, vector<8x768xf32>
    tpu.vector_store %arg9[%c0_8, %c0_9], %10 {strides = array<i32>} : memref<8x768xf32, #tpu.memory_space<vmem>>, vector<8x768xf32>,
    %c0_10 = arith.constant 0 : index
    %c0_11 = arith.constant 0 : index
    %12 = vector.load %arg10[%c0_10, %c0_11] : memref<8x1xf32, #tpu.memory_space<vmem>>, vector<8x1xf32>
    %cst_12 = arith.constant dense<0.000000e+00> : vector<8x1xf32>
    %13 = vector.multi_reduction <add>, %3, %cst_12 [1] : vector<8x16x1xf32> to vector<8x1xf32>
    %14 = arith.addf %12, %13 : vector<8x1xf32>
    %c0_13 = arith.constant 0 : index
    %c0_14 = arith.constant 0 : index
    %15 = vector.load %arg10[%c0_13, %c0_14] : memref<8x1xf32, #tpu.memory_space<vmem>>, vector<8x1xf32>
    tpu.vector_store %arg10[%c0_13, %c0_14], %14 {strides = array<i32>} : memref<8x1xf32, #tpu.memory_space<vmem>>, vector<8x1xf32>,
    %c0_i32_15 = arith.constant 0 : i32
    %16 = arith.cmpi eq, %arg1, %c0_i32_15 : i32
    %17 = arith.extui %16 : i1 to i32
    %c0_i32_16 = arith.constant 0 : i32
    %18 = arith.cmpi ne, %17, %c0_i32_16 : i32
    scf.if %18 {
      %c0_17 = arith.constant 0 : index
      %c0_18 = arith.constant 0 : index
      %19 = vector.load %arg9[%c0_17, %c0_18] : memref<8x768xf32, #tpu.memory_space<vmem>>, vector<8x768xf32>
      %c0_19 = arith.constant 0 : index
      %c0_20 = arith.constant 0 : index
      %20 = vector.load %arg10[%c0_19, %c0_20] : memref<8x1xf32, #tpu.memory_space<vmem>>, vector<8x1xf32>
      %cst_21 = arith.constant 1.000000e+00 : f32
      %21 = vector.broadcast %cst_21 : f32 to vector<8x1xf32>
      %22 = arith.maximumf %20, %21 : vector<8x1xf32>
      %23 = vector.broadcast %22 : vector<8x1xf32> to vector<8x768xf32>
      %24 = arith.divf %19, %23 : vector<8x768xf32>
      %25 = arith.truncf %24 : vector<8x768xf32> to vector<8x768xbf16>
      %c0_22 = arith.constant 0 : index
      %c0_23 = arith.constant 0 : index
      %26 = vector.load %arg4[%c0_22, %c0_23] : memref<768x768xbf16, #tpu.memory_space<vmem>>, vector<768x768xbf16>
      %cst_24 = arith.constant dense<0.000000e+00> : vector<8x768xf32>
      %27 = tpu.matmul %25, %26, %cst_24 {dimension_numbers = #tpu.dot_dimension_numbers<[1], [0], [0], [1], [0, 0, 1, 1], [], []>} : vector<8x768xbf16>, vector<768x768xbf16>, vector<8x768xf32> -> vector<8x768xf32>
      %c0_25 = arith.constant 0 : index
      %c0_26 = arith.constant 0 : index
      %28 = vector.load %arg5[%c0_25, %c0_26] : memref<1x768xf32, #tpu.memory_space<vmem>>, vector<1x768xf32>
      %29 = vector.broadcast %28 : vector<1x768xf32> to vector<8x768xf32>
      %30 = arith.addf %27, %29 : vector<8x768xf32>
      %31 = math.tanh %30 : vector<8x768xf32>
      %32 = arith.truncf %31 : vector<8x768xf32> to vector<8x768xbf16>
      %c0_27 = arith.constant 0 : index
      %c0_28 = arith.constant 0 : index
      %33 = vector.load %arg6[%c0_27, %c0_28] : memref<768x128xbf16, #tpu.memory_space<vmem>>, vector<768x128xbf16>
      %cst_29 = arith.constant dense<0.000000e+00> : vector<8x128xf32>
      %34 = tpu.matmul %32, %33, %cst_29 {dimension_numbers = #tpu.dot_dimension_numbers<[1], [0], [0], [1], [0, 0, 1, 1], [], []>} : vector<8x768xbf16>, vector<768x128xbf16>, vector<8x128xf32> -> vector<8x128xf32>
      %c0_30 = arith.constant 0 : index
      %c0_31 = arith.constant 0 : index
      %35 = vector.load %arg7[%c0_30, %c0_31] : memref<1x128xf32, #tpu.memory_space<vmem>>, vector<1x128xf32>
      %36 = vector.broadcast %35 : vector<1x128xf32> to vector<8x128xf32>
      %37 = arith.addf %34, %36 : vector<8x128xf32>
      %c0_32 = arith.constant 0 : index
      %c0_33 = arith.constant 0 : index
      %38 = vector.load %arg8[%c0_32, %c0_33] : memref<8x128xf32, #tpu.memory_space<vmem>>, vector<8x128xf32>
      tpu.vector_store %arg8[%c0_32, %c0_33], %37 {strides = array<i32>} : memref<8x128xf32, #tpu.memory_space<vmem>>, vector<8x128xf32>,
    } else {
    }
    return
  }
  func.func @transform_0(%arg0: i32, %arg1: i32) -> (i32, i32, i32) {
    %c0_i32 = arith.constant 0 : i32
    %c0_i32_0 = arith.constant 0 : i32
    return %arg0, %arg1, %c0_i32 : i32, i32, i32
  }
  func.func @transform_1(%arg0: i32, %arg1: i32) -> (i32, i32, i32) {
    %c0_i32 = arith.constant 0 : i32
    %c0_i32_0 = arith.constant 0 : i32
    return %arg0, %arg1, %c0_i32 : i32, i32, i32
  }
  func.func @transform_2(%arg0: i32, %arg1: i32) -> (i32, i32) {
    %c0_i32 = arith.constant 0 : i32
    %c0_i32_0 = arith.constant 0 : i32
    %c0_i32_1 = arith.constant 0 : i32
    return %c0_i32, %c0_i32_0 : i32, i32
  }
  func.func @transform_3(%arg0: i32, %arg1: i32) -> (i32, i32) {
    %c0_i32 = arith.constant 0 : i32
    %c0_i32_0 = arith.constant 0 : i32
    %c0_i32_1 = arith.constant 0 : i32
    return %c0_i32, %c0_i32_0 : i32, i32
  }
  func.func @transform_4(%arg0: i32, %arg1: i32) -> (i32, i32) {
    %c0_i32 = arith.constant 0 : i32
    %c0_i32_0 = arith.constant 0 : i32
    %c0_i32_1 = arith.constant 0 : i32
    return %c0_i32, %c0_i32_0 : i32, i32
  }
  func.func @transform_5(%arg0: i32, %arg1: i32) -> (i32, i32) {
    %c0_i32 = arith.constant 0 : i32
    %c0_i32_0 = arith.constant 0 : i32
    %c0_i32_1 = arith.constant 0 : i32
    return %c0_i32, %c0_i32_0 : i32, i32
  }
  func.func @transform_6(%arg0: i32, %arg1: i32) -> (i32, i32) {
    %c0_i32 = arith.constant 0 : i32
    %c0_i32_0 = arith.constant 0 : i32
    return %arg0, %c0_i32 : i32, i32
  }
}

</mosaic_0001>

<llo_original>
// kernel: sentiment_net_forward.1
$region0: #{sentiment_net_forward.1}
  #allocation0 [shape = 'u32[]', space=smem, size = 0x4, offset = 0x4, fixed_abs, tag = 'smem constant byte address 0x4 - core index']
  #allocation1 [shape = 'u32[144,128]{1,0:T(1,128)}', space=vmem, size = 0x12000, scoped, tag = 'internal scratch']
  #allocation2 [shape = 'f32[8,768]{1,0:T(8,128)}', space=vmem, size = 0x6000, scoped, tag = 'scratch operand']
  #allocation3 [shape = 'f32[8,1]{1,0:T(8,128)}', space=vmem, size = 0x1000, scoped, tag = 'scratch operand']
  %s0 = inlined_call_operand.vmem [shape: bf16[8,16,768], index: 0, kind: input, shape index: {}]
  %s1 = inlined_call_operand.vmem [shape: f32[8,16,1], index: 1, kind: input, shape index: {}]
  %s2 = inlined_call_operand.vmem [shape: bf16[768,768], index: 2, kind: input, shape index: {}]
  %s3 = inlined_call_operand.vmem [shape: f32[1,768], index: 3, kind: input, shape index: {}]
  %s4 = inlined_call_operand.vmem [shape: bf16[768,128], index: 4, kind: input, shape index: {}]
  %s5 = inlined_call_operand.vmem [shape: f32[1,128], index: 5, kind: input, shape index: {}]
  %s6 = inlined_call_operand.vmem [shape: f32[8,128], index: 6, kind: output, shape index: {}]
  %s7 = sld [smem:[#allocation0]]
  $region42: #{sentiment_net_forward.1} parent=0
    _
  %s9 = ssub.s32 1, %s7
  %s10 = scalar_select 0, %s9, %s7
  // Predicated region
  $region2: #{sentiment_net_forward.1} parent=0 // pred_check
    _
  $region3: #{sentiment_net_forward.1} parent=0 // pred_check_branch
    %12 = sbr.rel (0) target = $region5
  $region4: #{sentiment_net_forward.1} parent=0 // pred_region
    _
  $region5: #{sentiment_net_forward.1} parent=0 // pred_fallthru
    _
  // Predicated region
  $region6: #{sentiment_net_forward.1} parent=0 // pred_check
    _
  $region7: #{sentiment_net_forward.1} parent=0 // pred_check_branch
    %14 = sbr.rel (0) target = $region9
  $region8: #{sentiment_net_forward.1} parent=0 // pred_region
    _
  $region9: #{sentiment_net_forward.1} parent=0 // pred_fallthru
    _
  // Predicated region
  $region10: #{sentiment_net_forward.1} parent=0 // pred_check
    _
  $region11: #{sentiment_net_forward.1} parent=0 // pred_check_branch
    %16 = sbr.rel (0) target = $region13
  $region12: #{sentiment_net_forward.1} parent=0 // pred_region
    _
  $region13: #{sentiment_net_forward.1} parent=0 // pred_fallthru
    _
  // Predicated region
  $region14: #{sentiment_net_forward.1} parent=0 // pred_check
    _
  $region15: #{sentiment_net_forward.1} parent=0 // pred_check_branch
    %18 = sbr.rel (0) target = $region17
  $region16: #{sentiment_net_forward.1} parent=0 // pred_region
    _
  $region17: #{sentiment_net_forward.1} parent=0 // pred_fallthru
    _
  // Predicated region
  $region18: #{sentiment_net_forward.1} parent=0 // pred_check
    _
  $region19: #{sentiment_net_forward.1} parent=0 // pred_check_branch
    %20 = sbr.rel (0) target = $region21
  $region20: #{sentiment_net_forward.1} parent=0 // pred_region
    _
  $region21: #{sentiment_net_forward.1} parent=0 // pred_fallthru
    _
  // Predicated region
  $region22: #{sentiment_net_forward.1} parent=0 // pred_check
    _
  $region23: #{sentiment_net_forward.1} parent=0 // pred_check_branch
    %22 = sbr.rel (0) target = $region25
  $region24: #{sentiment_net_forward.1} parent=0 // pred_region
    _
  $region25: #{sentiment_net_forward.1} parent=0 // pred_fallthru
    _
  %p24 = scmp.eq.s32.totalorder 0, 0
  // Predicated region
  $region26: #{sentiment_net_forward.1} parent=0 // pred_check
    %p25 = pneg %p24
  $region27: #{sentiment_net_forward.1} parent=0 // pred_check_branch
    %27 = sbr.rel (%p25) target = $region29
  $region28: #{sentiment_net_forward.1} parent=0 // pred_region
    %28 = vst [vmem:[#allocation2] sm:$0xff] 0.0
    %29 = vst [vmem:[#allocation2 + $0x8] sm:$0xff] 0.0
    %30 = vst [vmem:[#allocation2 + $0x10] sm:$0xff] 0.0
    %31 = vst [vmem:[#allocation2 + $0x18] sm:$0xff] 0.0
    %32 = vst [vmem:[#allocation2 + $0x20] sm:$0xff] 0.0
    %33 = vst [vmem:[#allocation2 + $0x28] sm:$0xff] 0.0
    %vm34 = vcmask 7168
    %35 = vst.msk [vmem:[#allocation3] sm:$0xff] %vm34, 0.0
  $region29: #{sentiment_net_forward.1} parent=0 // pred_fallthru
    _
  %v36 = vld [vmem:[%s1] sm:$0xff]
  %v37 = vld [vmem:[%s1 + $0x8] sm:$0xff]
  %v38 = vld [vmem:[%s1 + $0x10] sm:$0xff]
  %v39 = vld [vmem:[%s1 + $0x18] sm:$0xff]
  %v40 = vld [vmem:[%s1 + $0x20] sm:$0xff]
  %v41 = vld [vmem:[%s1 + $0x28] sm:$0xff]
  %v42 = vld [vmem:[%s1 + $0x30] sm:$0xff]
  %v43 = vld [vmem:[%s1 + $0x38] sm:$0xff]
  %v44 = vld [vmem:[%s1 + $0x40] sm:$0xff]
  %v45 = vld [vmem:[%s1 + $0x48] sm:$0xff]
  %v46 = vld [vmem:[%s1 + $0x50] sm:$0xff]
  %v47 = vld [vmem:[%s1 + $0x58] sm:$0xff]
  %v48 = vld [vmem:[%s1 + $0x60] sm:$0xff]
  %v49 = vld [vmem:[%s1 + $0x68] sm:$0xff]
  %v50 = vld [vmem:[%s1 + $0x70] sm:$0xff]
  %v51 = vld [vmem:[%s1 + $0x78] sm:$0xff]
  %v52 = vld [vmem:[#allocation2] sm:$0xff]
  %v53 = vld [vmem:[#allocation2 + $0x8] sm:$0xff]
  %v54 = vld [vmem:[#allocation2 + $0x10] sm:$0xff]
  %v55 = vld [vmem:[#allocation2 + $0x18] sm:$0xff]
  %v56 = vld [vmem:[#allocation2 + $0x20] sm:$0xff]
  %v57 = vld [vmem:[#allocation2 + $0x28] sm:$0xff]
  %v58 = vld [vmem:[%s0] sm:$0xff]
  %v59 = vld [vmem:[%s0 + $0x8] sm:$0xff]
  %v60 = vld [vmem:[%s0 + $0x10] sm:$0xff]
  %v61 = vld [vmem:[%s0 + $0x18] sm:$0xff]
  %v62 = vld [vmem:[%s0 + $0x20] sm:$0xff]
  %v63 = vld [vmem:[%s0 + $0x28] sm:$0xff]
  %v64 = vld [vmem:[%s0 + $0x30] sm:$0xff]
  %v65 = vld [vmem:[%s0 + $0x38] sm:$0xff]
  %v66 = vld [vmem:[%s0 + $0x40] sm:$0xff]
  %v67 = vld [vmem:[%s0 + $0x48] sm:$0xff]
  %v68 = vld [vmem:[%s0 + $0x50] sm:$0xff]
  %v69 = vld [vmem:[%s0 + $0x58] sm:$0xff]
  %v70 = vld [vmem:[%s0 + $0x60] sm:$0xff]
  %v71 = vld [vmem:[%s0 + $0x68] sm:$0xff]
  %v72 = vld [vmem:[%s0 + $0x70] sm:$0xff]
  %v73 = vld [vmem:[%s0 + $0x78] sm:$0xff]
  %v74 = vld [vmem:[%s0 + $0x80] sm:$0xff]
  %v75 = vld [vmem:[%s0 + $0x88] sm:$0xff]
  %v76 = vld [vmem:[%s0 + $0x90] sm:$0xff]
  %v77 = vld [vmem:[%s0 + $0x98] sm:$0xff]
  %v78 = vld [vmem:[%s0 + $0xa0] sm:$0xff]
  %v79 = vld [vmem:[%s0 + $0xa8] sm:$0xff]
  %v80 = vld [vmem:[%s0 + $0xb0] sm:$0xff]
  %v81 = vld [vmem:[%s0 + $0xb8] sm:$0xff]
  %v82 = vld [vmem:[%s0 + $0xc0] sm:$0xff]
  %v83 = vld [vmem:[%s0 + $0xc8] sm:$0xff]
  %v84 = vld [vmem:[%s0 + $0xd0] sm:$0xff]
  %v85 = vld [vmem:[%s0 + $0xd8] sm:$0xff]
  %v86 = vld [vmem:[%s0 + $0xe0] sm:$0xff]
  %v87 = vld [vmem:[%s0 + $0xe8] sm:$0xff]
  %v88 = vld [vmem:[%s0 + $0xf0] sm:$0xff]
  %v89 = vld [vmem:[%s0 + $0xf8] sm:$0xff]
  %v90 = vld [vmem:[%s0 + $0x100] sm:$0xff]
  %v91 = vld [vmem:[%s0 + $0x108] sm:$0xff]
  %v92 = vld [vmem:[%s0 + $0x110] sm:$0xff]
  %v93 = vld [vmem:[%s0 + $0x118] sm:$0xff]
  %v94 = vld [vmem:[%s0 + $0x120] sm:$0xff]
  %v95 = vld [vmem:[%s0 + $0x128] sm:$0xff]
  %v96 = vld [vmem:[%s0 + $0x130] sm:$0xff]
  %v97 = vld [vmem:[%s0 + $0x138] sm:$0xff]
  %v98 = vld [vmem:[%s0 + $0x140] sm:$0xff]
  %v99 = vld [vmem:[%s0 + $0x148] sm:$0xff]
  %v100 = vld [vmem:[%s0 + $0x150] sm:$0xff]
  %v101 = vld [vmem:[%s0 + $0x158] sm:$0xff]
  %v102 = vld [vmem:[%s0 + $0x160] sm:$0xff]
  %v103 = vld [vmem:[%s0 + $0x168] sm:$0xff]
  %v104 = vld [vmem:[%s0 + $0x170] sm:$0xff]
  %v105 = vld [vmem:[%s0 + $0x178] sm:$0xff]
  %v106 = vunpack.c.l.bf16 %v58
  %v107 = vunpack.c.h.bf16 %v58
  %v108 = vunpack.c.l.bf16 %v59
  %v109 = vunpack.c.h.bf16 %v59
  %v110 = vunpack.c.l.bf16 %v60
  %v111 = vunpack.c.h.bf16 %v60
  %v112 = vunpack.c.l.bf16 %v61
  %v113 = vunpack.c.h.bf16 %v61
  %v114 = vunpack.c.l.bf16 %v62
  %v115 = vunpack.c.h.bf16 %v62
  %v116 = vunpack.c.l.bf16 %v63
  %v117 = vunpack.c.h.bf16 %v63
  %v118 = vunpack.c.l.bf16 %v64
  %v119 = vunpack.c.h.bf16 %v64
  %v120 = vunpack.c.l.bf16 %v65
  %v121 = vunpack.c.h.bf16 %v65
  %v122 = vunpack.c.l.bf16 %v66
  %v123 = vunpack.c.h.bf16 %v66
  %v124 = vunpack.c.l.bf16 %v67
  %v125 = vunpack.c.h.bf16 %v67
  %v126 = vunpack.c.l.bf16 %v68
  %v127 = vunpack.c.h.bf16 %v68
  %v128 = vunpack.c.l.bf16 %v69
  %v129 = vunpack.c.h.bf16 %v69
  %v130 = vunpack.c.l.bf16 %v70
  %v131 = vunpack.c.h.bf16 %v70
  %v132 = vunpack.c.l.bf16 %v71
  %v133 = vunpack.c.h.bf16 %v71
  %v134 = vunpack.c.l.bf16 %v72
  %v135 = vunpack.c.h.bf16 %v72
  %v136 = vunpack.c.l.bf16 %v73
  %v137 = vunpack.c.h.bf16 %v73
  %v138 = vunpack.c.l.bf16 %v74
  %v139 = vunpack.c.h.bf16 %v74
  %v140 = vunpack.c.l.bf16 %v75
  %v141 = vunpack.c.h.bf16 %v75
  %v142 = vunpack.c.l.bf16 %v76
  %v143 = vunpack.c.h.bf16 %v76
  %v144 = vunpack.c.l.bf16 %v77
  %v145 = vunpack.c.h.bf16 %v77
  %v146 = vunpack.c.l.bf16 %v78
  %v147 = vunpack.c.h.bf16 %v78
  %v148 = vunpack.c.l.bf16 %v79
  %v149 = vunpack.c.h.bf16 %v79
  %v150 = vunpack.c.l.bf16 %v80
  %v151 = vunpack.c.h.bf16 %v80
  %v152 = vunpack.c.l.bf16 %v81
  %v153 = vunpack.c.h.bf16 %v81
  %v154 = vunpack.c.l.bf16 %v82
  %v155 = vunpack.c.h.bf16 %v82
  %v156 = vunpack.c.l.bf16 %v83
  %v157 = vunpack.c.h.bf16 %v83
  %v158 = vunpack.c.l.bf16 %v84
  %v159 = vunpack.c.h.bf16 %v84
  %v160 = vunpack.c.l.bf16 %v85
  %v161 = vunpack.c.h.bf16 %v85
  %v162 = vunpack.c.l.bf16 %v86
  %v163 = vunpack.c.h.bf16 %v86
  %v164 = vunpack.c.l.bf16 %v87
  %v165 = vunpack.c.h.bf16 %v87
  %v166 = vunpack.c.l.bf16 %v88
  %v167 = vunpack.c.h.bf16 %v88
  %v168 = vunpack.c.l.bf16 %v89
  %v169 = vunpack.c.h.bf16 %v89
  %v170 = vunpack.c.l.bf16 %v90
  %v171 = vunpack.c.h.bf16 %v90
  %v172 = vunpack.c.l.bf16 %v91
  %v173 = vunpack.c.h.bf16 %v91
  %v174 = vunpack.c.l.bf16 %v92
  %v175 = vunpack.c.h.bf16 %v92
  %v176 = vunpack.c.l.bf16 %v93
  %v177 = vunpack.c.h.bf16 %v93
  %v178 = vunpack.c.l.bf16 %v94
  %v179 = vunpack.c.h.bf16 %v94
  %v180 = vunpack.c.l.bf16 %v95
  %v181 = vunpack.c.h.bf16 %v95
  %v182 = vunpack.c.l.bf16 %v96
  %v183 = vunpack.c.h.bf16 %v96
  %v184 = vunpack.c.l.bf16 %v97
  %v185 = vunpack.c.h.bf16 %v97
  %v186 = vunpack.c.l.bf16 %v98
  %v187 = vunpack.c.h.bf16 %v98
  %v188 = vunpack.c.l.bf16 %v99
  %v189 = vunpack.c.h.bf16 %v99
  %v190 = vunpack.c.l.bf16 %v100
  %v191 = vunpack.c.h.bf16 %v100
  %v192 = vunpack.c.l.bf16 %v101
  %v193 = vunpack.c.h.bf16 %v101
  %v194 = vunpack.c.l.bf16 %v102
  %v195 = vunpack.c.h.bf16 %v102
  %v196 = vunpack.c.l.bf16 %v103
  %v197 = vunpack.c.h.bf16 %v103
  %v198 = vunpack.c.l.bf16 %v104
  %v199 = vunpack.c.h.bf16 %v104
  %v200 = vunpack.c.l.bf16 %v105
  %v201 = vunpack.c.h.bf16 %v105
  %203 = vset.pattern.permute.xlu0 0
  %204 = vperm.xlu0 %203, %v36
  %v205 = vpop.permute.xlu0 %204
  %208 = vset.pattern.permute.xlu0 0
  %209 = vperm.xlu0 %208, %v37
  %v210 = vpop.permute.xlu0 %209
  %213 = vset.pattern.permute.xlu0 0
  %214 = vperm.xlu0 %213, %v38
  %v215 = vpop.permute.xlu0 %214
  %218 = vset.pattern.permute.xlu0 0
  %219 = vperm.xlu0 %218, %v39
  %v220 = vpop.permute.xlu0 %219
  %223 = vset.pattern.permute.xlu0 0
  %224 = vperm.xlu0 %223, %v40
  %v225 = vpop.permute.xlu0 %224
  %228 = vset.pattern.permute.xlu0 0
  %229 = vperm.xlu0 %228, %v41
  %v230 = vpop.permute.xlu0 %229
  %233 = vset.pattern.permute.xlu0 0
  %234 = vperm.xlu0 %233, %v42
  %v235 = vpop.permute.xlu0 %234
  %238 = vset.pattern.permute.xlu0 0
  %239 = vperm.xlu0 %238, %v43
  %v240 = vpop.permute.xlu0 %239
  %243 = vset.pattern.permute.xlu0 0
  %244 = vperm.xlu0 %243, %v44
  %v245 = vpop.permute.xlu0 %244
  %248 = vset.pattern.permute.xlu0 0
  %249 = vperm.xlu0 %248, %v45
  %v250 = vpop.permute.xlu0 %249
  %253 = vset.pattern.permute.xlu0 0
  %254 = vperm.xlu0 %253, %v46
  %v255 = vpop.permute.xlu0 %254
  %258 = vset.pattern.permute.xlu0 0
  %259 = vperm.xlu0 %258, %v47
  %v260 = vpop.permute.xlu0 %259
  %263 = vset.pattern.permute.xlu0 0
  %264 = vperm.xlu0 %263, %v48
  %v265 = vpop.permute.xlu0 %264
  %268 = vset.pattern.permute.xlu0 0
  %269 = vperm.xlu0 %268, %v49
  %v270 = vpop.permute.xlu0 %269
  %273 = vset.pattern.permute.xlu0 0
  %274 = vperm.xlu0 %273, %v50
  %v275 = vpop.permute.xlu0 %274
  %278 = vset.pattern.permute.xlu0 0
  %279 = vperm.xlu0 %278, %v51
  %v280 = vpop.permute.xlu0 %279
  %v282 = vmul.f32 %v106, %v205
  %v283 = vmul.f32 %v107, %v205
  %v284 = vmul.f32 %v108, %v205
  %v285 = vmul.f32 %v109, %v205
  %v286 = vmul.f32 %v110, %v205
  %v287 = vmul.f32 %v111, %v205
  %v288 = vmul.f32 %v112, %v210
  %v289 = vmul.f32 %v113, %v210
  %v290 = vmul.f32 %v114, %v210
  %v291 = vmul.f32 %v115, %v210
  %v292 = vmul.f32 %v116, %v210
  %v293 = vmul.f32 %v117, %v210
  %v294 = vmul.f32 %v118, %v215
  %v295 = vmul.f32 %v119, %v215
  %v296 = vmul.f32 %v120, %v215
  %v297 = vmul.f32 %v121, %v215
  %v298 = vmul.f32 %v122, %v215
  %v299 = vmul.f32 %v123, %v215
  %v300 = vmul.f32 %v124, %v220
  %v301 = vmul.f32 %v125, %v220
  %v302 = vmul.f32 %v126, %v220
  %v303 = vmul.f32 %v127, %v220
  %v304 = vmul.f32 %v128, %v220
  %v305 = vmul.f32 %v129, %v220
  %v306 = vmul.f32 %v130, %v225
  %v307 = vmul.f32 %v131, %v225
  %v308 = vmul.f32 %v132, %v225
  %v309 = vmul.f32 %v133, %v225
  %v310 = vmul.f32 %v134, %v225
  %v311 = vmul.f32 %v135, %v225
  %v312 = vmul.f32 %v136, %v230
  %v313 = vmul.f32 %v137, %v230
  %v314 = vmul.f32 %v138, %v230
  %v315 = vmul.f32 %v139, %v230
  %v316 = vmul.f32 %v140, %v230
  %v317 = vmul.f32 %v141, %v230
  %v318 = vmul.f32 %v142, %v235
  %v319 = vmul.f32 %v143, %v235
  %v320 = vmul.f32 %v144, %v235
  %v321 = vmul.f32 %v145, %v235
  %v322 = vmul.f32 %v146, %v235
  %v323 = vmul.f32 %v147, %v235
  %v324 = vmul.f32 %v148, %v240
  %v325 = vmul.f32 %v149, %v240
  %v326 = vmul.f32 %v150, %v240
  %v327 = vmul.f32 %v151, %v240
  %v328 = vmul.f32 %v152, %v240
  %v329 = vmul.f32 %v153, %v240
  %v330 = vmul.f32 %v154, %v245
  %v331 = vmul.f32 %v155, %v245
  %v332 = vmul.f32 %v156, %v245
  %v333 = vmul.f32 %v157, %v245
  %v334 = vmul.f32 %v158, %v245
  %v335 = vmul.f32 %v159, %v245
  %v336 = vmul.f32 %v160, %v250
  %v337 = vmul.f32 %v161, %v250
  %v338 = vmul.f32 %v162, %v250
  %v339 = vmul.f32 %v163, %v250
  %v340 = vmul.f32 %v164, %v250
  %v341 = vmul.f32 %v165, %v250
  %v342 = vmul.f32 %v166, %v255
  %v343 = vmul.f32 %v167, %v255
  %v344 = vmul.f32 %v168, %v255
  %v345 = vmul.f32 %v169, %v255
  %v346 = vmul.f32 %v170, %v255
  %v347 = vmul.f32 %v171, %v255
  %v348 = vmul.f32 %v172, %v260
  %v349 = vmul.f32 %v173, %v260
  %v350 = vmul.f32 %v174, %v260
  %v351 = vmul.f32 %v175, %v260
  %v352 = vmul.f32 %v176, %v260
  %v353 = vmul.f32 %v177, %v260
  %v354 = vmul.f32 %v178, %v265
  %v355 = vmul.f32 %v179, %v265
  %v356 = vmul.f32 %v180, %v265
  %v357 = vmul.f32 %v181, %v265
  %v358 = vmul.f32 %v182, %v265
  %v359 = vmul.f32 %v183, %v265
  %v360 = vmul.f32 %v184, %v270
  %v361 = vmul.f32 %v185, %v270
  %v362 = vmul.f32 %v186, %v270
  %v363 = vmul.f32 %v187, %v270
  %v364 = vmul.f32 %v188, %v270
  %v365 = vmul.f32 %v189, %v270
  %v366 = vmul.f32 %v190, %v275
  %v367 = vmul.f32 %v191, %v275
  %v368 = vmul.f32 %v192, %v275
  %v369 = vmul.f32 %v193, %v275
  %v370 = vmul.f32 %v194, %v275
  %v371 = vmul.f32 %v195, %v275
  %v372 = vmul.f32 %v196, %v280
  %v373 = vmul.f32 %v197, %v280
  %v374 = vmul.f32 %v198, %v280
  %v375 = vmul.f32 %v199, %v280
  %v376 = vmul.f32 %v200, %v280
  %v377 = vmul.f32 %v201, %v280
  %v378 = vadd.f32 %v282, %v288
  %v379 = vrot.slane %v378, 4
  %v380 = vadd.f32 %v378, %v379
  %v381 = vrot.slane %v380, 2
  %v382 = vadd.f32 %v380, %v381
  %v383 = vrot.slane %v382, 1
  %v384 = vadd.f32 %v382, %v383
  %v385 = vadd.f32 %v283, %v289
  %v386 = vrot.slane %v385, 4
  %v387 = vadd.f32 %v385, %v386
  %v388 = vrot.slane %v387, 2
  %v389 = vadd.f32 %v387, %v388
  %v390 = vrot.slane %v389, 1
  %v391 = vadd.f32 %v389, %v390
  %v392 = vadd.f32 %v284, %v290
  %v393 = vrot.slane %v392, 4
  %v394 = vadd.f32 %v392, %v393
  %v395 = vrot.slane %v394, 2
  %v396 = vadd.f32 %v394, %v395
  %v397 = vrot.slane %v396, 1
  %v398 = vadd.f32 %v396, %v397
  %v399 = vadd.f32 %v285, %v291
  %v400 = vrot.slane %v399, 4
  %v401 = vadd.f32 %v399, %v400
  %v402 = vrot.slane %v401, 2
  %v403 = vadd.f32 %v401, %v402
  %v404 = vrot.slane %v403, 1
  %v405 = vadd.f32 %v403, %v404
  %v406 = vadd.f32 %v286, %v292
  %v407 = vrot.slane %v406, 4
  %v408 = vadd.f32 %v406, %v407
  %v409 = vrot.slane %v408, 2
  %v410 = vadd.f32 %v408, %v409
  %v411 = vrot.slane %v410, 1
  %v412 = vadd.f32 %v410, %v411
  %v413 = vadd.f32 %v287, %v293
  %v414 = vrot.slane %v413, 4
  %v415 = vadd.f32 %v413, %v414
  %v416 = vrot.slane %v415, 2
  %v417 = vadd.f32 %v415, %v416
  %v418 = vrot.slane %v417, 1
  %v419 = vadd.f32 %v417, %v418
  %v420 = vadd.f32 %v294, %v300
  %v421 = vrot.slane %v420, 4
  %v422 = vadd.f32 %v420, %v421
  %v423 = vrot.slane %v422, 2
  %v424 = vadd.f32 %v422, %v423
  %v425 = vrot.slane %v424, 1
  %v426 = vadd.f32 %v424, %v425
  %v427 = vadd.f32 %v295, %v301
  %v428 = vrot.slane %v427, 4
  %v429 = vadd.f32 %v427, %v428
  %v430 = vrot.slane %v429, 2
  %v431 = vadd.f32 %v429, %v430
  %v432 = vrot.slane %v431, 1
  %v433 = vadd.f32 %v431, %v432
  %v434 = vadd.f32 %v296, %v302
  %v435 = vrot.slane %v434, 4
  %v436 = vadd.f32 %v434, %v435
  %v437 = vrot.slane %v436, 2
  %v438 = vadd.f32 %v436, %v437
  %v439 = vrot.slane %v438, 1
  %v440 = vadd.f32 %v438, %v439
  %v441 = vadd.f32 %v297, %v303
  %v442 = vrot.slane %v441, 4
  %v443 = vadd.f32 %v441, %v442
  %v444 = vrot.slane %v443, 2
  %v445 = vadd.f32 %v443, %v444
  %v446 = vrot.slane %v445, 1
  %v447 = vadd.f32 %v445, %v446
  %v448 = vadd.f32 %v298, %v304
  %v449 = vrot.slane %v448, 4
  %v450 = vadd.f32 %v448, %v449
  %v451 = vrot.slane %v450, 2
  %v452 = vadd.f32 %v450, %v451
  %v453 = vrot.slane %v452, 1
  %v454 = vadd.f32 %v452, %v453
  %v455 = vadd.f32 %v299, %v305
  %v456 = vrot.slane %v455, 4
  %v457 = vadd.f32 %v455, %v456
  %v458 = vrot.slane %v457, 2
  %v459 = vadd.f32 %v457, %v458
  %v460 = vrot.slane %v459, 1
  %v461 = vadd.f32 %v459, %v460
  %v462 = vadd.f32 %v306, %v312
  %v463 = vrot.slane %v462, 4
  %v464 = vadd.f32 %v462, %v463
  %v465 = vrot.slane %v464, 2
  %v466 = vadd.f32 %v464, %v465
  %v467 = vrot.slane %v466, 1
  %v468 = vadd.f32 %v466, %v467
  %v469 = vadd.f32 %v307, %v313
  %v470 = vrot.slane %v469, 4
  %v471 = vadd.f32 %v469, %v470
  %v472 = vrot.slane %v471, 2
  %v473 = vadd.f32 %v471, %v472
  %v474 = vrot.slane %v473, 1
  %v475 = vadd.f32 %v473, %v474
  %v476 = vadd.f32 %v308, %v314
  %v477 = vrot.slane %v476, 4
  %v478 = vadd.f32 %v476, %v477
  %v479 = vrot.slane %v478, 2
  %v480 = vadd.f32 %v478, %v479
  %v481 = vrot.slane %v480, 1
  %v482 = vadd.f32 %v480, %v481
  %v483 = vadd.f32 %v309, %v315
  %v484 = vrot.slane %v483, 4
  %v485 = vadd.f32 %v483, %v484
  %v486 = vrot.slane %v485, 2
  %v487 = vadd.f32 %v485, %v486
  %v488 = vrot.slane %v487, 1
  %v489 = vadd.f32 %v487, %v488
  %v490 = vadd.f32 %v310, %v316
  %v491 = vrot.slane %v490, 4
  %v492 = vadd.f32 %v490, %v491
  %v493 = vrot.slane %v492, 2
  %v494 = vadd.f32 %v492, %v493
  %v495 = vrot.slane %v494, 1
  %v496 = vadd.f32 %v494, %v495
  %v497 = vadd.f32 %v311, %v317
  %v498 = vrot.slane %v497, 4
  %v499 = vadd.f32 %v497, %v498
  %v500 = vrot.slane %v499, 2
  %v501 = vadd.f32 %v499, %v500
  %v502 = vrot.slane %v501, 1
  %v503 = vadd.f32 %v501, %v502
  %v504 = vadd.f32 %v318, %v324
  %v505 = vrot.slane %v504, 4
  %v506 = vadd.f32 %v504, %v505
  %v507 = vrot.slane %v506, 2
  %v508 = vadd.f32 %v506, %v507
  %v509 = vrot.slane %v508, 1
  %v510 = vadd.f32 %v508, %v509
  %v511 = vadd.f32 %v319, %v325
  %v512 = vrot.slane %v511, 4
  %v513 = vadd.f32 %v511, %v512
  %v514 = vrot.slane %v513, 2
  %v515 = vadd.f32 %v513, %v514
  %v516 = vrot.slane %v515, 1
  %v517 = vadd.f32 %v515, %v516
  %v518 = vadd.f32 %v320, %v326
  %v519 = vrot.slane %v518, 4
  %v520 = vadd.f32 %v518, %v519
  %v521 = vrot.slane %v520, 2
  %v522 = vadd.f32 %v520, %v521
  %v523 = vrot.slane %v522, 1
  %v524 = vadd.f32 %v522, %v523
  %v525 = vadd.f32 %v321, %v327
  %v526 = vrot.slane %v525, 4
  %v527 = vadd.f32 %v525, %v526
  %v528 = vrot.slane %v527, 2
  %v529 = vadd.f32 %v527, %v528
  %v530 = vrot.slane %v529, 1
  %v531 = vadd.f32 %v529, %v530
  %v532 = vadd.f32 %v322, %v328
  %v533 = vrot.slane %v532, 4
  %v534 = vadd.f32 %v532, %v533
  %v535 = vrot.slane %v534, 2
  %v536 = vadd.f32 %v534, %v535
  %v537 = vrot.slane %v536, 1
  %v538 = vadd.f32 %v536, %v537
  %v539 = vadd.f32 %v323, %v329
  %v540 = vrot.slane %v539, 4
  %v541 = vadd.f32 %v539, %v540
  %v542 = vrot.slane %v541, 2
  %v543 = vadd.f32 %v541, %v542
  %v544 = vrot.slane %v543, 1
  %v545 = vadd.f32 %v543, %v544
  %v546 = vadd.f32 %v330, %v336
  %v547 = vrot.slane %v546, 4
  %v548 = vadd.f32 %v546, %v547
  %v549 = vrot.slane %v548, 2
  %v550 = vadd.f32 %v548, %v549
  %v551 = vrot.slane %v550, 1
  %v552 = vadd.f32 %v550, %v551
  %v553 = vadd.f32 %v331, %v337
  %v554 = vrot.slane %v553, 4
  %v555 = vadd.f32 %v553, %v554
  %v556 = vrot.slane %v555, 2
  %v557 = vadd.f32 %v555, %v556
  %v558 = vrot.slane %v557, 1
  %v559 = vadd.f32 %v557, %v558
  %v560 = vadd.f32 %v332, %v338
  %v561 = vrot.slane %v560, 4
  %v562 = vadd.f32 %v560, %v561
  %v563 = vrot.slane %v562, 2
  %v564 = vadd.f32 %v562, %v563
  %v565 = vrot.slane %v564, 1
  %v566 = vadd.f32 %v564, %v565
  %v567 = vadd.f32 %v333, %v339
  %v568 = vrot.slane %v567, 4
  %v569 = vadd.f32 %v567, %v568
  %v570 = vrot.slane %v569, 2
  %v571 = vadd.f32 %v569, %v570
  %v572 = vrot.slane %v571, 1
  %v573 = vadd.f32 %v571, %v572
  %v574 = vadd.f32 %v334, %v340
  %v575 = vrot.slane %v574, 4
  %v576 = vadd.f32 %v574, %v575
  %v577 = vrot.slane %v576, 2
  %v578 = vadd.f32 %v576, %v577
  %v579 = vrot.slane %v578, 1
  %v580 = vadd.f32 %v578, %v579
  %v581 = vadd.f32 %v335, %v341
  %v582 = vrot.slane %v581, 4
  %v583 = vadd.f32 %v581, %v582
  %v584 = vrot.slane %v583, 2
  %v585 = vadd.f32 %v583, %v584
  %v586 = vrot.slane %v585, 1
  %v587 = vadd.f32 %v585, %v586
  %v588 = vadd.f32 %v342, %v348
  %v589 = vrot.slane %v588, 4
  %v590 = vadd.f32 %v588, %v589
  %v591 = vrot.slane %v590, 2
  %v592 = vadd.f32 %v590, %v591
  %v593 = vrot.slane %v592, 1
  %v594 = vadd.f32 %v592, %v593
  %v595 = vadd.f32 %v343, %v349
  %v596 = vrot.slane %v595, 4
  %v597 = vadd.f32 %v595, %v596
  %v598 = vrot.slane %v597, 2
  %v599 = vadd.f32 %v597, %v598
  %v600 = vrot.slane %v599, 1
  %v601 = vadd.f32 %v599, %v600
  %v602 = vadd.f32 %v344, %v350
  %v603 = vrot.slane %v602, 4
  %v604 = vadd.f32 %v602, %v603
  %v605 = vrot.slane %v604, 2
  %v606 = vadd.f32 %v604, %v605
  %v607 = vrot.slane %v606, 1
  %v608 = vadd.f32 %v606, %v607
  %v609 = vadd.f32 %v345, %v351
  %v610 = vrot.slane %v609, 4
  %v611 = vadd.f32 %v609, %v610
  %v612 = vrot.slane %v611, 2
  %v613 = vadd.f32 %v611, %v612
  %v614 = vrot.slane %v613, 1
  %v615 = vadd.f32 %v613, %v614
  %v616 = vadd.f32 %v346, %v352
  %v617 = vrot.slane %v616, 4
  %v618 = vadd.f32 %v616, %v617
  %v619 = vrot.slane %v618, 2
  %v620 = vadd.f32 %v618, %v619
  %v621 = vrot.slane %v620, 1
  %v622 = vadd.f32 %v620, %v621
  %v623 = vadd.f32 %v347, %v353
  %v624 = vrot.slane %v623, 4
  %v625 = vadd.f32 %v623, %v624
  %v626 = vrot.slane %v625, 2
  %v627 = vadd.f32 %v625, %v626
  %v628 = vrot.slane %v627, 1
  %v629 = vadd.f32 %v627, %v628
  %v630 = vadd.f32 %v354, %v360
  %v631 = vrot.slane %v630, 4
  %v632 = vadd.f32 %v630, %v631
  %v633 = vrot.slane %v632, 2
  %v634 = vadd.f32 %v632, %v633
  %v635 = vrot.slane %v634, 1
  %v636 = vadd.f32 %v634, %v635
  %v637 = vadd.f32 %v355, %v361
  %v638 = vrot.slane %v637, 4
  %v639 = vadd.f32 %v637, %v638
  %v640 = vrot.slane %v639, 2
  %v641 = vadd.f32 %v639, %v640
  %v642 = vrot.slane %v641, 1
  %v643 = vadd.f32 %v641, %v642
  %v644 = vadd.f32 %v356, %v362
  %v645 = vrot.slane %v644, 4
  %v646 = vadd.f32 %v644, %v645
  %v647 = vrot.slane %v646, 2
  %v648 = vadd.f32 %v646, %v647
  %v649 = vrot.slane %v648, 1
  %v650 = vadd.f32 %v648, %v649
  %v651 = vadd.f32 %v357, %v363
  %v652 = vrot.slane %v651, 4
  %v653 = vadd.f32 %v651, %v652
  %v654 = vrot.slane %v653, 2
  %v655 = vadd.f32 %v653, %v654
  %v656 = vrot.slane %v655, 1
  %v657 = vadd.f32 %v655, %v656
  %v658 = vadd.f32 %v358, %v364
  %v659 = vrot.slane %v658, 4
  %v660 = vadd.f32 %v658, %v659
  %v661 = vrot.slane %v660, 2
  %v662 = vadd.f32 %v660, %v661
  %v663 = vrot.slane %v662, 1
  %v664 = vadd.f32 %v662, %v663
  %v665 = vadd.f32 %v359, %v365
  %v666 = vrot.slane %v665, 4
  %v667 = vadd.f32 %v665, %v666
  %v668 = vrot.slane %v667, 2
  %v669 = vadd.f32 %v667, %v668
  %v670 = vrot.slane %v669, 1
  %v671 = vadd.f32 %v669, %v670
  %v672 = vadd.f32 %v366, %v372
  %v673 = vrot.slane %v672, 4
  %v674 = vadd.f32 %v672, %v673
  %v675 = vrot.slane %v674, 2
  %v676 = vadd.f32 %v674, %v675
  %v677 = vrot.slane %v676, 1
  %v678 = vadd.f32 %v676, %v677
  %v679 = vadd.f32 %v367, %v373
  %v680 = vrot.slane %v679, 4
  %v681 = vadd.f32 %v679, %v680
  %v682 = vrot.slane %v681, 2
  %v683 = vadd.f32 %v681, %v682
  %v684 = vrot.slane %v683, 1
  %v685 = vadd.f32 %v683, %v684
  %v686 = vadd.f32 %v368, %v374
  %v687 = vrot.slane %v686, 4
  %v688 = vadd.f32 %v686, %v687
  %v689 = vrot.slane %v688, 2
  %v690 = vadd.f32 %v688, %v689
  %v691 = vrot.slane %v690, 1
  %v692 = vadd.f32 %v690, %v691
  %v693 = vadd.f32 %v369, %v375
  %v694 = vrot.slane %v693, 4
  %v695 = vadd.f32 %v693, %v694
  %v696 = vrot.slane %v695, 2
  %v697 = vadd.f32 %v695, %v696
  %v698 = vrot.slane %v697, 1
  %v699 = vadd.f32 %v697, %v698
  %v700 = vadd.f32 %v370, %v376
  %v701 = vrot.slane %v700, 4
  %v702 = vadd.f32 %v700, %v701
  %v703 = vrot.slane %v702, 2
  %v704 = vadd.f32 %v702, %v703
  %v705 = vrot.slane %v704, 1
  %v706 = vadd.f32 %v704, %v705
  %v707 = vadd.f32 %v371, %v377
  %v708 = vrot.slane %v707, 4
  %v709 = vadd.f32 %v707, %v708
  %v710 = vrot.slane %v709, 2
  %v711 = vadd.f32 %v709, %v710
  %v712 = vrot.slane %v711, 1
  %v713 = vadd.f32 %v711, %v712
  %vm762 = vcmask 1041409
  %v763 = vsel %vm762, %v426, %v384
  %vm764 = vcmask 1042434
  %v765 = vsel %vm764, %v468, %v763
  %vm766 = vcmask 1043459
  %v767 = vsel %vm766, %v510, %v765
  %vm768 = vcmask 1044484
  %v769 = vsel %vm768, %v552, %v767
  %vm770 = vcmask 1045509
  %v771 = vsel %vm770, %v594, %v769
  %vm772 = vcmask 1046534
  %v773 = vsel %vm772, %v636, %v771
  %vm774 = vcmask 1047559
  %v775 = vsel %vm774, %v678, %v773
  %v776 = vsel %vm762, %v433, %v391
  %v777 = vsel %vm764, %v475, %v776
  %v778 = vsel %vm766, %v517, %v777
  %v779 = vsel %vm768, %v559, %v778
  %v780 = vsel %vm770, %v601, %v779
  %v781 = vsel %vm772, %v643, %v780
  %v782 = vsel %vm774, %v685, %v781
  %v783 = vsel %vm762, %v440, %v398
  %v784 = vsel %vm764, %v482, %v783
  %v785 = vsel %vm766, %v524, %v784
  %v786 = vsel %vm768, %v566, %v785
  %v787 = vsel %vm770, %v608, %v786
  %v788 = vsel %vm772, %v650, %v787
  %v789 = vsel %vm774, %v692, %v788
  %v790 = vsel %vm762, %v447, %v405
  %v791 = vsel %vm764, %v489, %v790
  %v792 = vsel %vm766, %v531, %v791
  %v793 = vsel %vm768, %v573, %v792
  %v794 = vsel %vm770, %v615, %v793
  %v795 = vsel %vm772, %v657, %v794
  %v796 = vsel %vm774, %v699, %v795
  %v797 = vsel %vm762, %v454, %v412
  %v798 = vsel %vm764, %v496, %v797
  %v799 = vsel %vm766, %v538, %v798
  %v800 = vsel %vm768, %v580, %v799
  %v801 = vsel %vm770, %v622, %v800
  %v802 = vsel %vm772, %v664, %v801
  %v803 = vsel %vm774, %v706, %v802
  %v804 = vsel %vm762, %v461, %v419
  %v805 = vsel %vm764, %v503, %v804
  %v806 = vsel %vm766, %v545, %v805
  %v807 = vsel %vm768, %v587, %v806
  %v808 = vsel %vm770, %v629, %v807
  %v809 = vsel %vm772, %v671, %v808
  %v810 = vsel %vm774, %v713, %v809
  %v817 = vadd.f32 %v52, %v775
  %v818 = vadd.f32 %v53, %v782
  %v819 = vadd.f32 %v54, %v789
  %v820 = vadd.f32 %v55, %v796
  %v821 = vadd.f32 %v56, %v803
  %v822 = vadd.f32 %v57, %v810
  %823 = vst [vmem:[#allocation2] sm:$0xff] %v817
  %824 = vst [vmem:[#allocation2 + $0x8] sm:$0xff] %v818
  %825 = vst [vmem:[#allocation2 + $0x10] sm:$0xff] %v819
  %826 = vst [vmem:[#allocation2 + $0x18] sm:$0xff] %v820
  %827 = vst [vmem:[#allocation2 + $0x20] sm:$0xff] %v821
  %828 = vst [vmem:[#allocation2 + $0x28] sm:$0xff] %v822
  %v829 = vld [vmem:[#allocation3] sm:$0xff]
  %vm830 = vcmask 7168
  %v831 = vsel %vm830, %v36, 0.0
  %v832 = vsel %vm830, %v37, 0.0
  %v833 = vadd.f32 %v831, %v832
  %v834 = vrot.slane %v833, 4
  %v835 = vadd.f32 %v833, %v834
  %v836 = vrot.slane %v835, 2
  %v837 = vadd.f32 %v835, %v836
  %v838 = vrot.slane %v837, 1
  %v839 = vadd.f32 %v837, %v838
  %v840 = vsel %vm830, %v38, 0.0
  %v841 = vsel %vm830, %v39, 0.0
  %v842 = vadd.f32 %v840, %v841
  %v843 = vrot.slane %v842, 4
  %v844 = vadd.f32 %v842, %v843
  %v845 = vrot.slane %v844, 2
  %v846 = vadd.f32 %v844, %v845
  %v847 = vrot.slane %v846, 1
  %v848 = vadd.f32 %v846, %v847
  %v849 = vsel %vm830, %v40, 0.0
  %v850 = vsel %vm830, %v41, 0.0
  %v851 = vadd.f32 %v849, %v850
  %v852 = vrot.slane %v851, 4
  %v853 = vadd.f32 %v851, %v852
  %v854 = vrot.slane %v853, 2
  %v855 = vadd.f32 %v853, %v854
  %v856 = vrot.slane %v855, 1
  %v857 = vadd.f32 %v855, %v856
  %v858 = vsel %vm830, %v42, 0.0
  %v859 = vsel %vm830, %v43, 0.0
  %v860 = vadd.f32 %v858, %v859
  %v861 = vrot.slane %v860, 4
  %v862 = vadd.f32 %v860, %v861
  %v863 = vrot.slane %v862, 2
  %v864 = vadd.f32 %v862, %v863
  %v865 = vrot.slane %v864, 1
  %v866 = vadd.f32 %v864, %v865
  %v867 = vsel %vm830, %v44, 0.0
  %v868 = vsel %vm830, %v45, 0.0
  %v869 = vadd.f32 %v867, %v868
  %v870 = vrot.slane %v869, 4
  %v871 = vadd.f32 %v869, %v870
  %v872 = vrot.slane %v871, 2
  %v873 = vadd.f32 %v871, %v872
  %v874 = vrot.slane %v873, 1
  %v875 = vadd.f32 %v873, %v874
  %v876 = vsel %vm830, %v46, 0.0
  %v877 = vsel %vm830, %v47, 0.0
  %v878 = vadd.f32 %v876, %v877
  %v879 = vrot.slane %v878, 4
  %v880 = vadd.f32 %v878, %v879
  %v881 = vrot.slane %v880, 2
  %v882 = vadd.f32 %v880, %v881
  %v883 = vrot.slane %v882, 1
  %v884 = vadd.f32 %v882, %v883
  %v885 = vsel %vm830, %v48, 0.0
  %v886 = vsel %vm830, %v49, 0.0
  %v887 = vadd.f32 %v885, %v886
  %v888 = vrot.slane %v887, 4
  %v889 = vadd.f32 %v887, %v888
  %v890 = vrot.slane %v889, 2
  %v891 = vadd.f32 %v889, %v890
  %v892 = vrot.slane %v891, 1
  %v893 = vadd.f32 %v891, %v892
  %v894 = vsel %vm830, %v50, 0.0
  %v895 = vsel %vm830, %v51, 0.0
  %v896 = vadd.f32 %v894, %v895
  %v897 = vrot.slane %v896, 4
  %v898 = vadd.f32 %v896, %v897
  %v899 = vrot.slane %v898, 2
  %v900 = vadd.f32 %v898, %v899
  %v901 = vrot.slane %v900, 1
  %v902 = vadd.f32 %v900, %v901
  %v911 = vsel %vm762, %v848, %v839
  %v912 = vsel %vm764, %v857, %v911
  %v913 = vsel %vm766, %v866, %v912
  %v914 = vsel %vm768, %v875, %v913
  %v915 = vsel %vm770, %v884, %v914
  %v916 = vsel %vm772, %v893, %v915
  %v917 = vsel %vm774, %v902, %v916
  %v919 = vadd.f32 %v829, %v917
  %920 = vst.msk [vmem:[#allocation3] sm:$0xff] %vm830, %v919
  // Predicated region
  $region30: #{sentiment_net_forward.1} parent=0 // pred_check
    %p921 = pneg %p24
  $region31: #{sentiment_net_forward.1} parent=0 // pred_check_branch
    %923 = sbr.rel (%p921) target = $region33
  $region32: #{sentiment_net_forward.1} parent=0 // pred_region
    %v924 = vld [vmem:[#allocation2] sm:$0xff]
    %v925 = vld [vmem:[#allocation2 + $0x8] sm:$0xff]
    %v926 = vld [vmem:[#allocation2 + $0x10] sm:$0xff]
    %v927 = vld [vmem:[#allocation2 + $0x18] sm:$0xff]
    %v928 = vld [vmem:[#allocation2 + $0x20] sm:$0xff]
    %v929 = vld [vmem:[#allocation2 + $0x28] sm:$0xff]
    %v930 = vld [vmem:[#allocation3] sm:$0xff]
    %v931 = vmax.f32 %v930, 1.0
    %933 = vset.pattern.permute.xlu0 0
    %934 = vperm.xlu0 %933, %v931
    %v935 = vpop.permute.xlu0 %934
    %v937 = vrcp.pop %v935
    %v938 = vmul.f32 %v924, %v937
    %v939 = vmul.f32 %v925, %v937
    %v940 = vmul.f32 %v926, %v937
    %v941 = vmul.f32 %v927, %v937
    %v942 = vmul.f32 %v928, %v937
    %v943 = vmul.f32 %v929, %v937
    %v944 = vpack.c.bf16 %v938, %v938
    %v945 = vpack.c.bf16 %v939, %v939
    %v946 = vpack.c.bf16 %v940, %v940
    %v947 = vpack.c.bf16 %v941, %v941
    %v948 = vpack.c.bf16 %v942, %v942
    %v949 = vpack.c.bf16 %v943, %v943
    %v950 = vld [vmem:[%s2] sm:$0xff]
    %v951 = vld [vmem:[%s2 + $0x8] sm:$0xff]
    %v952 = vld [vmem:[%s2 + $0x10] sm:$0xff]
    %v953 = vld [vmem:[%s2 + $0x18] sm:$0xff]
    %v954 = vld [vmem:[%s2 + $0x20] sm:$0xff]
    %v955 = vld [vmem:[%s2 + $0x28] sm:$0xff]
    %v956 = vld [vmem:[%s2 + $0x30] sm:$0xff]
    %v957 = vld [vmem:[%s2 + $0x38] sm:$0xff]
    %v958 = vld [vmem:[%s2 + $0x40] sm:$0xff]
    %v959 = vld [vmem:[%s2 + $0x48] sm:$0xff]
    %v960 = vld [vmem:[%s2 + $0x50] sm:$0xff]
    %v961 = vld [vmem:[%s2 + $0x58] sm:$0xff]
    %v962 = vld [vmem:[%s2 + $0x60] sm:$0xff]
    %v963 = vld [vmem:[%s2 + $0x68] sm:$0xff]
    %v964 = vld [vmem:[%s2 + $0x70] sm:$0xff]
    %v965 = vld [vmem:[%s2 + $0x78] sm:$0xff]
    %v966 = vld [vmem:[%s2 + $0x80] sm:$0xff]
    %v967 = vld [vmem:[%s2 + $0x88] sm:$0xff]
    %v968 = vld [vmem:[%s2 + $0x90] sm:$0xff]
    %v969 = vld [vmem:[%s2 + $0x98] sm:$0xff]
    %v970 = vld [vmem:[%s2 + $0xa0] sm:$0xff]
    %v971 = vld [vmem:[%s2 + $0xa8] sm:$0xff]
    %v972 = vld [vmem:[%s2 + $0xb0] sm:$0xff]
    %v973 = vld [vmem:[%s2 + $0xb8] sm:$0xff]
    %v974 = vld [vmem:[%s2 + $0xc0] sm:$0xff]
    %v975 = vld [vmem:[%s2 + $0xc8] sm:$0xff]
    %v976 = vld [vmem:[%s2 + $0xd0] sm:$0xff]
    %v977 = vld [vmem:[%s2 + $0xd8] sm:$0xff]
    %v978 = vld [vmem:[%s2 + $0xe0] sm:$0xff]
    %v979 = vld [vmem:[%s2 + $0xe8] sm:$0xff]
    %v980 = vld [vmem:[%s2 + $0xf0] sm:$0xff]
    %v981 = vld [vmem:[%s2 + $0xf8] sm:$0xff]
    %v982 = vld [vmem:[%s2 + $0x100] sm:$0xff]
    %v983 = vld [vmem:[%s2 + $0x108] sm:$0xff]
    %v984 = vld [vmem:[%s2 + $0x110] sm:$0xff]
    %v985 = vld [vmem:[%s2 + $0x118] sm:$0xff]
    %v986 = vld [vmem:[%s2 + $0x120] sm:$0xff]
    %v987 = vld [vmem:[%s2 + $0x128] sm:$0xff]
    %v988 = vld [vmem:[%s2 + $0x130] sm:$0xff]
    %v989 = vld [vmem:[%s2 + $0x138] sm:$0xff]
    %v990 = vld [vmem:[%s2 + $0x140] sm:$0xff]
    %v991 = vld [vmem:[%s2 + $0x148] sm:$0xff]
    %v992 = vld [vmem:[%s2 + $0x150] sm:$0xff]
    %v993 = vld [vmem:[%s2 + $0x158] sm:$0xff]
    %v994 = vld [vmem:[%s2 + $0x160] sm:$0xff]
    %v995 = vld [vmem:[%s2 + $0x168] sm:$0xff]
    %v996 = vld [vmem:[%s2 + $0x170] sm:$0xff]
    %v997 = vld [vmem:[%s2 + $0x178] sm:$0xff]
    %v998 = vld [vmem:[%s2 + $0x180] sm:$0xff]
    %v999 = vld [vmem:[%s2 + $0x188] sm:$0xff]
    %v1000 = vld [vmem:[%s2 + $0x190] sm:$0xff]
    %v1001 = vld [vmem:[%s2 + $0x198] sm:$0xff]
    %v1002 = vld [vmem:[%s2 + $0x1a0] sm:$0xff]
    %v1003 = vld [vmem:[%s2 + $0x1a8] sm:$0xff]
    %v1004 = vld [vmem:[%s2 + $0x1b0] sm:$0xff]
    %v1005 = vld [vmem:[%s2 + $0x1b8] sm:$0xff]
    %v1006 = vld [vmem:[%s2 + $0x1c0] sm:$0xff]
    %v1007 = vld [vmem:[%s2 + $0x1c8] sm:$0xff]
    %v1008 = vld [vmem:[%s2 + $0x1d0] sm:$0xff]
    %v1009 = vld [vmem:[%s2 + $0x1d8] sm:$0xff]
    %v1010 = vld [vmem:[%s2 + $0x1e0] sm:$0xff]
    %v1011 = vld [vmem:[%s2 + $0x1e8] sm:$0xff]
    %v1012 = vld [vmem:[%s2 + $0x1f0] sm:$0xff]
    %v1013 = vld [vmem:[%s2 + $0x1f8] sm:$0xff]
    %v1014 = vld [vmem:[%s2 + $0x200] sm:$0xff]
    %v1015 = vld [vmem:[%s2 + $0x208] sm:$0xff]
    %v1016 = vld [vmem:[%s2 + $0x210] sm:$0xff]
    %v1017 = vld [vmem:[%s2 + $0x218] sm:$0xff]
    %v1018 = vld [vmem:[%s2 + $0x220] sm:$0xff]
    %v1019 = vld [vmem:[%s2 + $0x228] sm:$0xff]
    %v1020 = vld [vmem:[%s2 + $0x230] sm:$0xff]
    %v1021 = vld [vmem:[%s2 + $0x238] sm:$0xff]
    %v1022 = vld [vmem:[%s2 + $0x240] sm:$0xff]
    %v1023 = vld [vmem:[%s2 + $0x248] sm:$0xff]
    %v1024 = vld [vmem:[%s2 + $0x250] sm:$0xff]
    %v1025 = vld [vmem:[%s2 + $0x258] sm:$0xff]
    %v1026 = vld [vmem:[%s2 + $0x260] sm:$0xff]
    %v1027 = vld [vmem:[%s2 + $0x268] sm:$0xff]
    %v1028 = vld [vmem:[%s2 + $0x270] sm:$0xff]
    %v1029 = vld [vmem:[%s2 + $0x278] sm:$0xff]
    %v1030 = vld [vmem:[%s2 + $0x280] sm:$0xff]
    %v1031 = vld [vmem:[%s2 + $0x288] sm:$0xff]
    %v1032 = vld [vmem:[%s2 + $0x290] sm:$0xff]
    %v1033 = vld [vmem:[%s2 + $0x298] sm:$0xff]
    %v1034 = vld [vmem:[%s2 + $0x2a0] sm:$0xff]
    %v1035 = vld [vmem:[%s2 + $0x2a8] sm:$0xff]
    %v1036 = vld [vmem:[%s2 + $0x2b0] sm:$0xff]
    %v1037 = vld [vmem:[%s2 + $0x2b8] sm:$0xff]
    %v1038 = vld [vmem:[%s2 + $0x2c0] sm:$0xff]
    %v1039 = vld [vmem:[%s2 + $0x2c8] sm:$0xff]
    %v1040 = vld [vmem:[%s2 + $0x2d0] sm:$0xff]
    %v1041 = vld [vmem:[%s2 + $0x2d8] sm:$0xff]
    %v1042 = vld [vmem:[%s2 + $0x2e0] sm:$0xff]
    %v1043 = vld [vmem:[%s2 + $0x2e8] sm:$0xff]
    %v1044 = vld [vmem:[%s2 + $0x2f0] sm:$0xff]
    %v1045 = vld [vmem:[%s2 + $0x2f8] sm:$0xff]
    %v1046 = vld [vmem:[%s2 + $0x300] sm:$0xff]
    %v1047 = vld [vmem:[%s2 + $0x308] sm:$0xff]
    %v1048 = vld [vmem:[%s2 + $0x310] sm:$0xff]
    %v1049 = vld [vmem:[%s2 + $0x318] sm:$0xff]
    %v1050 = vld [vmem:[%s2 + $0x320] sm:$0xff]
    %v1051 = vld [vmem:[%s2 + $0x328] sm:$0xff]
    %v1052 = vld [vmem:[%s2 + $0x330] sm:$0xff]
    %v1053 = vld [vmem:[%s2 + $0x338] sm:$0xff]
    %v1054 = vld [vmem:[%s2 + $0x340] sm:$0xff]
    %v1055 = vld [vmem:[%s2 + $0x348] sm:$0xff]
    %v1056 = vld [vmem:[%s2 + $0x350] sm:$0xff]
    %v1057 = vld [vmem:[%s2 + $0x358] sm:$0xff]
    %v1058 = vld [vmem:[%s2 + $0x360] sm:$0xff]
    %v1059 = vld [vmem:[%s2 + $0x368] sm:$0xff]
    %v1060 = vld [vmem:[%s2 + $0x370] sm:$0xff]
    %v1061 = vld [vmem:[%s2 + $0x378] sm:$0xff]
    %v1062 = vld [vmem:[%s2 + $0x380] sm:$0xff]
    %v1063 = vld [vmem:[%s2 + $0x388] sm:$0xff]
    %v1064 = vld [vmem:[%s2 + $0x390] sm:$0xff]
    %v1065 = vld [vmem:[%s2 + $0x398] sm:$0xff]
    %v1066 = vld [vmem:[%s2 + $0x3a0] sm:$0xff]
    %v1067 = vld [vmem:[%s2 + $0x3a8] sm:$0xff]
    %v1068 = vld [vmem:[%s2 + $0x3b0] sm:$0xff]
    %v1069 = vld [vmem:[%s2 + $0x3b8] sm:$0xff]
    %v1070 = vld [vmem:[%s2 + $0x3c0] sm:$0xff]
    %v1071 = vld [vmem:[%s2 + $0x3c8] sm:$0xff]
    %v1072 = vld [vmem:[%s2 + $0x3d0] sm:$0xff]
    %v1073 = vld [vmem:[%s2 + $0x3d8] sm:$0xff]
    %v1074 = vld [vmem:[%s2 + $0x3e0] sm:$0xff]
    %v1075 = vld [vmem:[%s2 + $0x3e8] sm:$0xff]
    %v1076 = vld [vmem:[%s2 + $0x3f0] sm:$0xff]
    %v1077 = vld [vmem:[%s2 + $0x3f8] sm:$0xff]
    %v1078 = vld [vmem:[%s2 + $0x400] sm:$0xff]
    %v1079 = vld [vmem:[%s2 + $0x408] sm:$0xff]
    %v1080 = vld [vmem:[%s2 + $0x410] sm:$0xff]
    %v1081 = vld [vmem:[%s2 + $0x418] sm:$0xff]
    %v1082 = vld [vmem:[%s2 + $0x420] sm:$0xff]
    %v1083 = vld [vmem:[%s2 + $0x428] sm:$0xff]
    %v1084 = vld [vmem:[%s2 + $0x430] sm:$0xff]
    %v1085 = vld [vmem:[%s2 + $0x438] sm:$0xff]
    %v1086 = vld [vmem:[%s2 + $0x440] sm:$0xff]
    %v1087 = vld [vmem:[%s2 + $0x448] sm:$0xff]
    %v1088 = vld [vmem:[%s2 + $0x450] sm:$0xff]
    %v1089 = vld [vmem:[%s2 + $0x458] sm:$0xff]
    %v1090 = vld [vmem:[%s2 + $0x460] sm:$0xff]
    %v1091 = vld [vmem:[%s2 + $0x468] sm:$0xff]
    %v1092 = vld [vmem:[%s2 + $0x470] sm:$0xff]
    %v1093 = vld [vmem:[%s2 + $0x478] sm:$0xff]
    %v1094 = vld [vmem:[%s2 + $0x480] sm:$0xff]
    %v1095 = vld [vmem:[%s2 + $0x488] sm:$0xff]
    %v1096 = vld [vmem:[%s2 + $0x490] sm:$0xff]
    %v1097 = vld [vmem:[%s2 + $0x498] sm:$0xff]
    %v1098 = vld [vmem:[%s2 + $0x4a0] sm:$0xff]
    %v1099 = vld [vmem:[%s2 + $0x4a8] sm:$0xff]
    %v1100 = vld [vmem:[%s2 + $0x4b0] sm:$0xff]
    %v1101 = vld [vmem:[%s2 + $0x4b8] sm:$0xff]
    %v1102 = vld [vmem:[%s2 + $0x4c0] sm:$0xff]
    %v1103 = vld [vmem:[%s2 + $0x4c8] sm:$0xff]
    %v1104 = vld [vmem:[%s2 + $0x4d0] sm:$0xff]
    %v1105 = vld [vmem:[%s2 + $0x4d8] sm:$0xff]
    %v1106 = vld [vmem:[%s2 + $0x4e0] sm:$0xff]
    %v1107 = vld [vmem:[%s2 + $0x4e8] sm:$0xff]
    %v1108 = vld [vmem:[%s2 + $0x4f0] sm:$0xff]
    %v1109 = vld [vmem:[%s2 + $0x4f8] sm:$0xff]
    %v1110 = vld [vmem:[%s2 + $0x500] sm:$0xff]
    %v1111 = vld [vmem:[%s2 + $0x508] sm:$0xff]
    %v1112 = vld [vmem:[%s2 + $0x510] sm:$0xff]
    %v1113 = vld [vmem:[%s2 + $0x518] sm:$0xff]
    %v1114 = vld [vmem:[%s2 + $0x520] sm:$0xff]
    %v1115 = vld [vmem:[%s2 + $0x528] sm:$0xff]
    %v1116 = vld [vmem:[%s2 + $0x530] sm:$0xff]
    %v1117 = vld [vmem:[%s2 + $0x538] sm:$0xff]
    %v1118 = vld [vmem:[%s2 + $0x540] sm:$0xff]
    %v1119 = vld [vmem:[%s2 + $0x548] sm:$0xff]
    %v1120 = vld [vmem:[%s2 + $0x550] sm:$0xff]
    %v1121 = vld [vmem:[%s2 + $0x558] sm:$0xff]
    %v1122 = vld [vmem:[%s2 + $0x560] sm:$0xff]
    %v1123 = vld [vmem:[%s2 + $0x568] sm:$0xff]
    %v1124 = vld [vmem:[%s2 + $0x570] sm:$0xff]
    %v1125 = vld [vmem:[%s2 + $0x578] sm:$0xff]
    %v1126 = vld [vmem:[%s2 + $0x580] sm:$0xff]
    %v1127 = vld [vmem:[%s2 + $0x588] sm:$0xff]
    %v1128 = vld [vmem:[%s2 + $0x590] sm:$0xff]
    %v1129 = vld [vmem:[%s2 + $0x598] sm:$0xff]
    %v1130 = vld [vmem:[%s2 + $0x5a0] sm:$0xff]
    %v1131 = vld [vmem:[%s2 + $0x5a8] sm:$0xff]
    %v1132 = vld [vmem:[%s2 + $0x5b0] sm:$0xff]
    %v1133 = vld [vmem:[%s2 + $0x5b8] sm:$0xff]
    %v1134 = vld [vmem:[%s2 + $0x5c0] sm:$0xff]
    %v1135 = vld [vmem:[%s2 + $0x5c8] sm:$0xff]
    %v1136 = vld [vmem:[%s2 + $0x5d0] sm:$0xff]
    %v1137 = vld [vmem:[%s2 + $0x5d8] sm:$0xff]
    %v1138 = vld [vmem:[%s2 + $0x5e0] sm:$0xff]
    %v1139 = vld [vmem:[%s2 + $0x5e8] sm:$0xff]
    %v1140 = vld [vmem:[%s2 + $0x5f0] sm:$0xff]
    %v1141 = vld [vmem:[%s2 + $0x5f8] sm:$0xff]
    %v1142 = vld [vmem:[%s2 + $0x600] sm:$0xff]
    %v1143 = vld [vmem:[%s2 + $0x608] sm:$0xff]
    %v1144 = vld [vmem:[%s2 + $0x610] sm:$0xff]
    %v1145 = vld [vmem:[%s2 + $0x618] sm:$0xff]
    %v1146 = vld [vmem:[%s2 + $0x620] sm:$0xff]
    %v1147 = vld [vmem:[%s2 + $0x628] sm:$0xff]
    %v1148 = vld [vmem:[%s2 + $0x630] sm:$0xff]
    %v1149 = vld [vmem:[%s2 + $0x638] sm:$0xff]
    %v1150 = vld [vmem:[%s2 + $0x640] sm:$0xff]
    %v1151 = vld [vmem:[%s2 + $0x648] sm:$0xff]
    %v1152 = vld [vmem:[%s2 + $0x650] sm:$0xff]
    %v1153 = vld [vmem:[%s2 + $0x658] sm:$0xff]
    %v1154 = vld [vmem:[%s2 + $0x660] sm:$0xff]
    %v1155 = vld [vmem:[%s2 + $0x668] sm:$0xff]
    %v1156 = vld [vmem:[%s2 + $0x670] sm:$0xff]
    %v1157 = vld [vmem:[%s2 + $0x678] sm:$0xff]
    %v1158 = vld [vmem:[%s2 + $0x680] sm:$0xff]
    %v1159 = vld [vmem:[%s2 + $0x688] sm:$0xff]
    %v1160 = vld [vmem:[%s2 + $0x690] sm:$0xff]
    %v1161 = vld [vmem:[%s2 + $0x698] sm:$0xff]
    %v1162 = vld [vmem:[%s2 + $0x6a0] sm:$0xff]
    %v1163 = vld [vmem:[%s2 + $0x6a8] sm:$0xff]
    %v1164 = vld [vmem:[%s2 + $0x6b0] sm:$0xff]
    %v1165 = vld [vmem:[%s2 + $0x6b8] sm:$0xff]
    %v1166 = vld [vmem:[%s2 + $0x6c0] sm:$0xff]
    %v1167 = vld [vmem:[%s2 + $0x6c8] sm:$0xff]
    %v1168 = vld [vmem:[%s2 + $0x6d0] sm:$0xff]
    %v1169 = vld [vmem:[%s2 + $0x6d8] sm:$0xff]
    %v1170 = vld [vmem:[%s2 + $0x6e0] sm:$0xff]
    %v1171 = vld [vmem:[%s2 + $0x6e8] sm:$0xff]
    %v1172 = vld [vmem:[%s2 + $0x6f0] sm:$0xff]
    %v1173 = vld [vmem:[%s2 + $0x6f8] sm:$0xff]
    %v1174 = vld [vmem:[%s2 + $0x700] sm:$0xff]
    %v1175 = vld [vmem:[%s2 + $0x708] sm:$0xff]
    %v1176 = vld [vmem:[%s2 + $0x710] sm:$0xff]
    %v1177 = vld [vmem:[%s2 + $0x718] sm:$0xff]
    %v1178 = vld [vmem:[%s2 + $0x720] sm:$0xff]
    %v1179 = vld [vmem:[%s2 + $0x728] sm:$0xff]
    %v1180 = vld [vmem:[%s2 + $0x730] sm:$0xff]
    %v1181 = vld [vmem:[%s2 + $0x738] sm:$0xff]
    %v1182 = vld [vmem:[%s2 + $0x740] sm:$0xff]
    %v1183 = vld [vmem:[%s2 + $0x748] sm:$0xff]
    %v1184 = vld [vmem:[%s2 + $0x750] sm:$0xff]
    %v1185 = vld [vmem:[%s2 + $0x758] sm:$0xff]
    %v1186 = vld [vmem:[%s2 + $0x760] sm:$0xff]
    %v1187 = vld [vmem:[%s2 + $0x768] sm:$0xff]
    %v1188 = vld [vmem:[%s2 + $0x770] sm:$0xff]
    %v1189 = vld [vmem:[%s2 + $0x778] sm:$0xff]
    %v1190 = vld [vmem:[%s2 + $0x780] sm:$0xff]
    %v1191 = vld [vmem:[%s2 + $0x788] sm:$0xff]
    %v1192 = vld [vmem:[%s2 + $0x790] sm:$0xff]
    %v1193 = vld [vmem:[%s2 + $0x798] sm:$0xff]
    %v1194 = vld [vmem:[%s2 + $0x7a0] sm:$0xff]
    %v1195 = vld [vmem:[%s2 + $0x7a8] sm:$0xff]
    %v1196 = vld [vmem:[%s2 + $0x7b0] sm:$0xff]
    %v1197 = vld [vmem:[%s2 + $0x7b8] sm:$0xff]
    %v1198 = vld [vmem:[%s2 + $0x7c0] sm:$0xff]
    %v1199 = vld [vmem:[%s2 + $0x7c8] sm:$0xff]
    %v1200 = vld [vmem:[%s2 + $0x7d0] sm:$0xff]
    %v1201 = vld [vmem:[%s2 + $0x7d8] sm:$0xff]
    %v1202 = vld [vmem:[%s2 + $0x7e0] sm:$0xff]
    %v1203 = vld [vmem:[%s2 + $0x7e8] sm:$0xff]
    %v1204 = vld [vmem:[%s2 + $0x7f0] sm:$0xff]
    %v1205 = vld [vmem:[%s2 + $0x7f8] sm:$0xff]
    %v1206 = vld [vmem:[%s2 + $0x800] sm:$0xff]
    %v1207 = vld [vmem:[%s2 + $0x808] sm:$0xff]
    %v1208 = vld [vmem:[%s2 + $0x810] sm:$0xff]
    %v1209 = vld [vmem:[%s2 + $0x818] sm:$0xff]
    %v1210 = vld [vmem:[%s2 + $0x820] sm:$0xff]
    %v1211 = vld [vmem:[%s2 + $0x828] sm:$0xff]
    %v1212 = vld [vmem:[%s2 + $0x830] sm:$0xff]
    %v1213 = vld [vmem:[%s2 + $0x838] sm:$0xff]
    %v1214 = vld [vmem:[%s2 + $0x840] sm:$0xff]
    %v1215 = vld [vmem:[%s2 + $0x848] sm:$0xff]
    %v1216 = vld [vmem:[%s2 + $0x850] sm:$0xff]
    %v1217 = vld [vmem:[%s2 + $0x858] sm:$0xff]
    %v1218 = vld [vmem:[%s2 + $0x860] sm:$0xff]
    %v1219 = vld [vmem:[%s2 + $0x868] sm:$0xff]
    %v1220 = vld [vmem:[%s2 + $0x870] sm:$0xff]
    %v1221 = vld [vmem:[%s2 + $0x878] sm:$0xff]
    %v1222 = vld [vmem:[%s2 + $0x880] sm:$0xff]
    %v1223 = vld [vmem:[%s2 + $0x888] sm:$0xff]
    %v1224 = vld [vmem:[%s2 + $0x890] sm:$0xff]
    %v1225 = vld [vmem:[%s2 + $0x898] sm:$0xff]
    %v1226 = vld [vmem:[%s2 + $0x8a0] sm:$0xff]
    %v1227 = vld [vmem:[%s2 + $0x8a8] sm:$0xff]
    %v1228 = vld [vmem:[%s2 + $0x8b0] sm:$0xff]
    %v1229 = vld [vmem:[%s2 + $0x8b8] sm:$0xff]
    %v1230 = vld [vmem:[%s2 + $0x8c0] sm:$0xff]
    %v1231 = vld [vmem:[%s2 + $0x8c8] sm:$0xff]
    %v1232 = vld [vmem:[%s2 + $0x8d0] sm:$0xff]
    %v1233 = vld [vmem:[%s2 + $0x8d8] sm:$0xff]
    %v1234 = vld [vmem:[%s2 + $0x8e0] sm:$0xff]
    %v1235 = vld [vmem:[%s2 + $0x8e8] sm:$0xff]
    %v1236 = vld [vmem:[%s2 + $0x8f0] sm:$0xff]
    %v1237 = vld [vmem:[%s2 + $0x8f8] sm:$0xff]
    %v1238 = vld [vmem:[%s3] sm:$0x3f]
    %v1240 = vlaneseq
    %v1241 = vshrl.u32 %v1240, 7
    %v1242 = vsub.s32 0, %v1241
    %v1243 = vrot.slane %v1238, %v1242
    %v1244 = vlaneseq
    %v1245 = vshrl.u32 %v1244, 7
    %v1246 = vsub.s32 1, %v1245
    %v1247 = vrot.slane %v1238, %v1246
    %v1248 = vlaneseq
    %v1249 = vshrl.u32 %v1248, 7
    %v1250 = vsub.s32 2, %v1249
    %v1251 = vrot.slane %v1238, %v1250
    %v1252 = vlaneseq
    %v1253 = vshrl.u32 %v1252, 7
    %v1254 = vsub.s32 3, %v1253
    %v1255 = vrot.slane %v1238, %v1254
    %v1256 = vlaneseq
    %v1257 = vshrl.u32 %v1256, 7
    %v1258 = vsub.s32 4, %v1257
    %v1259 = vrot.slane %v1238, %v1258
    %v1260 = vlaneseq
    %v1261 = vshrl.u32 %v1260, 7
    %v1262 = vsub.s32 5, %v1261
    %v1263 = vrot.slane %v1238, %v1262
    %v1558 = vunpack.c.l.b16 %v950
    %v1559 = vunpack.c.h.b16 %v950
    %v1560 = vunpack.c.l.b16 %v951
    %v1561 = vunpack.c.h.b16 %v951
    %v1562 = vunpack.c.l.b16 %v952
    %v1563 = vunpack.c.h.b16 %v952
    %v1564 = vunpack.c.l.b16 %v953
    %v1565 = vunpack.c.h.b16 %v953
    %v1566 = vunpack.c.l.b16 %v954
    %v1567 = vunpack.c.h.b16 %v954
    %v1568 = vunpack.c.l.b16 %v955
    %v1569 = vunpack.c.h.b16 %v955
    %v1570 = vunpack.c.l.b16 %v956
    %v1571 = vunpack.c.h.b16 %v956
    %v1572 = vunpack.c.l.b16 %v957
    %v1573 = vunpack.c.h.b16 %v957
    %v1574 = vunpack.c.l.b16 %v958
    %v1575 = vunpack.c.h.b16 %v958
    %v1576 = vunpack.c.l.b16 %v959
    %v1577 = vunpack.c.h.b16 %v959
    %v1578 = vunpack.c.l.b16 %v960
    %v1579 = vunpack.c.h.b16 %v960
    %v1580 = vunpack.c.l.b16 %v961
    %v1581 = vunpack.c.h.b16 %v961
    %v1582 = vunpack.c.l.b16 %v962
    %v1583 = vunpack.c.h.b16 %v962
    %v1584 = vunpack.c.l.b16 %v963
    %v1585 = vunpack.c.h.b16 %v963
    %v1586 = vunpack.c.l.b16 %v964
    %v1587 = vunpack.c.h.b16 %v964
    %v1588 = vunpack.c.l.b16 %v965
    %v1589 = vunpack.c.h.b16 %v965
    %v1590 = vunpack.c.l.b16 %v966
    %v1591 = vunpack.c.h.b16 %v966
    %v1592 = vunpack.c.l.b16 %v967
    %v1593 = vunpack.c.h.b16 %v967
    %v1594 = vunpack.c.l.b16 %v968
    %v1595 = vunpack.c.h.b16 %v968
    %v1596 = vunpack.c.l.b16 %v969
    %v1597 = vunpack.c.h.b16 %v969
    %v1598 = vunpack.c.l.b16 %v970
    %v1599 = vunpack.c.h.b16 %v970
    %v1600 = vunpack.c.l.b16 %v971
    %v1601 = vunpack.c.h.b16 %v971
    %v1602 = vunpack.c.l.b16 %v972
    %v1603 = vunpack.c.h.b16 %v972
    %v1604 = vunpack.c.l.b16 %v973
    %v1605 = vunpack.c.h.b16 %v973
    %v1606 = vunpack.c.l.b16 %v974
    %v1607 = vunpack.c.h.b16 %v974
    %v1608 = vunpack.c.l.b16 %v975
    %v1609 = vunpack.c.h.b16 %v975
    %v1610 = vunpack.c.l.b16 %v976
    %v1611 = vunpack.c.h.b16 %v976
    %v1612 = vunpack.c.l.b16 %v977
    %v1613 = vunpack.c.h.b16 %v977
    %v1614 = vunpack.c.l.b16 %v978
    %v1615 = vunpack.c.h.b16 %v978
    %v1616 = vunpack.c.l.b16 %v979
    %v1617 = vunpack.c.h.b16 %v979
    %v1618 = vunpack.c.l.b16 %v980
    %v1619 = vunpack.c.h.b16 %v980
    %v1620 = vunpack.c.l.b16 %v981
    %v1621 = vunpack.c.h.b16 %v981
    %v1622 = vunpack.c.l.b16 %v982
    %v1623 = vunpack.c.h.b16 %v982
    %v1624 = vunpack.c.l.b16 %v983
    %v1625 = vunpack.c.h.b16 %v983
    %v1626 = vunpack.c.l.b16 %v984
    %v1627 = vunpack.c.h.b16 %v984
    %v1628 = vunpack.c.l.b16 %v985
    %v1629 = vunpack.c.h.b16 %v985
    %v1630 = vunpack.c.l.b16 %v986
    %v1631 = vunpack.c.h.b16 %v986
    %v1632 = vunpack.c.l.b16 %v987
    %v1633 = vunpack.c.h.b16 %v987
    %v1634 = vunpack.c.l.b16 %v988
    %v1635 = vunpack.c.h.b16 %v988
    %v1636 = vunpack.c.l.b16 %v989
    %v1637 = vunpack.c.h.b16 %v989
    %v1638 = vunpack.c.l.b16 %v990
    %v1639 = vunpack.c.h.b16 %v990
    %v1640 = vunpack.c.l.b16 %v991
    %v1641 = vunpack.c.h.b16 %v991
    %v1642 = vunpack.c.l.b16 %v992
    %v1643 = vunpack.c.h.b16 %v992
    %v1644 = vunpack.c.l.b16 %v993
    %v1645 = vunpack.c.h.b16 %v993
    %v1646 = vunpack.c.l.b16 %v994
    %v1647 = vunpack.c.h.b16 %v994
    %v1648 = vunpack.c.l.b16 %v995
    %v1649 = vunpack.c.h.b16 %v995
    %v1650 = vunpack.c.l.b16 %v996
    %v1651 = vunpack.c.h.b16 %v996
    %v1652 = vunpack.c.l.b16 %v997
    %v1653 = vunpack.c.h.b16 %v997
    %v1654 = vunpack.c.l.b16 %v998
    %v1655 = vunpack.c.h.b16 %v998
    %v1656 = vunpack.c.l.b16 %v999
    %v1657 = vunpack.c.h.b16 %v999
    %v1658 = vunpack.c.l.b16 %v1000
    %v1659 = vunpack.c.h.b16 %v1000
    %v1660 = vunpack.c.l.b16 %v1001
    %v1661 = vunpack.c.h.b16 %v1001
    %v1662 = vunpack.c.l.b16 %v1002
    %v1663 = vunpack.c.h.b16 %v1002
    %v1664 = vunpack.c.l.b16 %v1003
    %v1665 = vunpack.c.h.b16 %v1003
    %v1666 = vunpack.c.l.b16 %v1004
    %v1667 = vunpack.c.h.b16 %v1004
    %v1668 = vunpack.c.l.b16 %v1005
    %v1669 = vunpack.c.h.b16 %v1005
    %v1670 = vunpack.c.l.b16 %v1006
    %v1671 = vunpack.c.h.b16 %v1006
    %v1672 = vunpack.c.l.b16 %v1007
    %v1673 = vunpack.c.h.b16 %v1007
    %v1674 = vunpack.c.l.b16 %v1008
    %v1675 = vunpack.c.h.b16 %v1008
    %v1676 = vunpack.c.l.b16 %v1009
    %v1677 = vunpack.c.h.b16 %v1009
    %v1678 = vunpack.c.l.b16 %v1010
    %v1679 = vunpack.c.h.b16 %v1010
    %v1680 = vunpack.c.l.b16 %v1011
    %v1681 = vunpack.c.h.b16 %v1011
    %v1682 = vunpack.c.l.b16 %v1012
    %v1683 = vunpack.c.h.b16 %v1012
    %v1684 = vunpack.c.l.b16 %v1013
    %v1685 = vunpack.c.h.b16 %v1013
    %v1686 = vunpack.c.l.b16 %v1014
    %v1687 = vunpack.c.h.b16 %v1014
    %v1688 = vunpack.c.l.b16 %v1015
    %v1689 = vunpack.c.h.b16 %v1015
    %v1690 = vunpack.c.l.b16 %v1016
    %v1691 = vunpack.c.h.b16 %v1016
    %v1692 = vunpack.c.l.b16 %v1017
    %v1693 = vunpack.c.h.b16 %v1017
    %v1694 = vunpack.c.l.b16 %v1018
    %v1695 = vunpack.c.h.b16 %v1018
    %v1696 = vunpack.c.l.b16 %v1019
    %v1697 = vunpack.c.h.b16 %v1019
    %v1698 = vunpack.c.l.b16 %v1020
    %v1699 = vunpack.c.h.b16 %v1020
    %v1700 = vunpack.c.l.b16 %v1021
    %v1701 = vunpack.c.h.b16 %v1021
    %v1702 = vunpack.c.l.b16 %v1022
    %v1703 = vunpack.c.h.b16 %v1022
    %v1704 = vunpack.c.l.b16 %v1023
    %v1705 = vunpack.c.h.b16 %v1023
    %v1706 = vunpack.c.l.b16 %v1024
    %v1707 = vunpack.c.h.b16 %v1024
    %v1708 = vunpack.c.l.b16 %v1025
    %v1709 = vunpack.c.h.b16 %v1025
    %v1710 = vunpack.c.l.b16 %v1026
    %v1711 = vunpack.c.h.b16 %v1026
    %v1712 = vunpack.c.l.b16 %v1027
    %v1713 = vunpack.c.h.b16 %v1027
    %v1714 = vunpack.c.l.b16 %v1028
    %v1715 = vunpack.c.h.b16 %v1028
    %v1716 = vunpack.c.l.b16 %v1029
    %v1717 = vunpack.c.h.b16 %v1029
    %v1718 = vunpack.c.l.b16 %v1030
    %v1719 = vunpack.c.h.b16 %v1030
    %v1720 = vunpack.c.l.b16 %v1031
    %v1721 = vunpack.c.h.b16 %v1031
    %v1722 = vunpack.c.l.b16 %v1032
    %v1723 = vunpack.c.h.b16 %v1032
    %v1724 = vunpack.c.l.b16 %v1033
    %v1725 = vunpack.c.h.b16 %v1033
    %v1726 = vunpack.c.l.b16 %v1034
    %v1727 = vunpack.c.h.b16 %v1034
    %v1728 = vunpack.c.l.b16 %v1035
    %v1729 = vunpack.c.h.b16 %v1035
    %v1730 = vunpack.c.l.b16 %v1036
    %v1731 = vunpack.c.h.b16 %v1036
    %v1732 = vunpack.c.l.b16 %v1037
    %v1733 = vunpack.c.h.b16 %v1037
    %v1734 = vunpack.c.l.b16 %v1038
    %v1735 = vunpack.c.h.b16 %v1038
    %v1736 = vunpack.c.l.b16 %v1039
    %v1737 = vunpack.c.h.b16 %v1039
    %v1738 = vunpack.c.l.b16 %v1040
    %v1739 = vunpack.c.h.b16 %v1040
    %v1740 = vunpack.c.l.b16 %v1041
    %v1741 = vunpack.c.h.b16 %v1041
    %v1742 = vunpack.c.l.b16 %v1042
    %v1743 = vunpack.c.h.b16 %v1042
    %v1744 = vunpack.c.l.b16 %v1043
    %v1745 = vunpack.c.h.b16 %v1043
    %v1746 = vunpack.c.l.b16 %v1044
    %v1747 = vunpack.c.h.b16 %v1044
    %v1748 = vunpack.c.l.b16 %v1045
    %v1749 = vunpack.c.h.b16 %v1045
    %v1750 = vunpack.c.l.b16 %v1046
    %v1751 = vunpack.c.h.b16 %v1046
    %v1752 = vunpack.c.l.b16 %v1047
    %v1753 = vunpack.c.h.b16 %v1047
    %v1754 = vunpack.c.l.b16 %v1048
    %v1755 = vunpack.c.h.b16 %v1048
    %v1756 = vunpack.c.l.b16 %v1049
    %v1757 = vunpack.c.h.b16 %v1049
    %v1758 = vunpack.c.l.b16 %v1050
    %v1759 = vunpack.c.h.b16 %v1050
    %v1760 = vunpack.c.l.b16 %v1051
    %v1761 = vunpack.c.h.b16 %v1051
    %v1762 = vunpack.c.l.b16 %v1052
    %v1763 = vunpack.c.h.b16 %v1052
    %v1764 = vunpack.c.l.b16 %v1053
    %v1765 = vunpack.c.h.b16 %v1053
    %v1766 = vunpack.c.l.b16 %v1054
    %v1767 = vunpack.c.h.b16 %v1054
    %v1768 = vunpack.c.l.b16 %v1055
    %v1769 = vunpack.c.h.b16 %v1055
    %v1770 = vunpack.c.l.b16 %v1056
    %v1771 = vunpack.c.h.b16 %v1056
    %v1772 = vunpack.c.l.b16 %v1057
    %v1773 = vunpack.c.h.b16 %v1057
    %v1774 = vunpack.c.l.b16 %v1058
    %v1775 = vunpack.c.h.b16 %v1058
    %v1776 = vunpack.c.l.b16 %v1059
    %v1777 = vunpack.c.h.b16 %v1059
    %v1778 = vunpack.c.l.b16 %v1060
    %v1779 = vunpack.c.h.b16 %v1060
    %v1780 = vunpack.c.l.b16 %v1061
    %v1781 = vunpack.c.h.b16 %v1061
    %v1782 = vunpack.c.l.b16 %v1062
    %v1783 = vunpack.c.h.b16 %v1062
    %v1784 = vunpack.c.l.b16 %v1063
    %v1785 = vunpack.c.h.b16 %v1063
    %v1786 = vunpack.c.l.b16 %v1064
    %v1787 = vunpack.c.h.b16 %v1064
    %v1788 = vunpack.c.l.b16 %v1065
    %v1789 = vunpack.c.h.b16 %v1065
    %v1790 = vunpack.c.l.b16 %v1066
    %v1791 = vunpack.c.h.b16 %v1066
    %v1792 = vunpack.c.l.b16 %v1067
    %v1793 = vunpack.c.h.b16 %v1067
    %v1794 = vunpack.c.l.b16 %v1068
    %v1795 = vunpack.c.h.b16 %v1068
    %v1796 = vunpack.c.l.b16 %v1069
    %v1797 = vunpack.c.h.b16 %v1069
    %v1798 = vunpack.c.l.b16 %v1070
    %v1799 = vunpack.c.h.b16 %v1070
    %v1800 = vunpack.c.l.b16 %v1071
    %v1801 = vunpack.c.h.b16 %v1071
    %v1802 = vunpack.c.l.b16 %v1072
    %v1803 = vunpack.c.h.b16 %v1072
    %v1804 = vunpack.c.l.b16 %v1073
    %v1805 = vunpack.c.h.b16 %v1073
    %v1806 = vunpack.c.l.b16 %v1074
    %v1807 = vunpack.c.h.b16 %v1074
    %v1808 = vunpack.c.l.b16 %v1075
    %v1809 = vunpack.c.h.b16 %v1075
    %v1810 = vunpack.c.l.b16 %v1076
    %v1811 = vunpack.c.h.b16 %v1076
    %v1812 = vunpack.c.l.b16 %v1077
    %v1813 = vunpack.c.h.b16 %v1077
    %v1814 = vunpack.c.l.b16 %v1078
    %v1815 = vunpack.c.h.b16 %v1078
    %v1816 = vunpack.c.l.b16 %v1079
    %v1817 = vunpack.c.h.b16 %v1079
    %v1818 = vunpack.c.l.b16 %v1080
    %v1819 = vunpack.c.h.b16 %v1080
    %v1820 = vunpack.c.l.b16 %v1081
    %v1821 = vunpack.c.h.b16 %v1081
    %v1822 = vunpack.c.l.b16 %v1082
    %v1823 = vunpack.c.h.b16 %v1082
    %v1824 = vunpack.c.l.b16 %v1083
    %v1825 = vunpack.c.h.b16 %v1083
    %v1826 = vunpack.c.l.b16 %v1084
    %v1827 = vunpack.c.h.b16 %v1084
    %v1828 = vunpack.c.l.b16 %v1085
    %v1829 = vunpack.c.h.b16 %v1085
    %v1830 = vunpack.c.l.b16 %v1086
    %v1831 = vunpack.c.h.b16 %v1086
    %v1832 = vunpack.c.l.b16 %v1087
    %v1833 = vunpack.c.h.b16 %v1087
    %v1834 = vunpack.c.l.b16 %v1088
    %v1835 = vunpack.c.h.b16 %v1088
    %v1836 = vunpack.c.l.b16 %v1089
    %v1837 = vunpack.c.h.b16 %v1089
    %v1838 = vunpack.c.l.b16 %v1090
    %v1839 = vunpack.c.h.b16 %v1090
    %v1840 = vunpack.c.l.b16 %v1091
    %v1841 = vunpack.c.h.b16 %v1091
    %v1842 = vunpack.c.l.b16 %v1092
    %v1843 = vunpack.c.h.b16 %v1092
    %v1844 = vunpack.c.l.b16 %v1093
    %v1845 = vunpack.c.h.b16 %v1093
    %v1846 = vunpack.c.l.b16 %v1094
    %v1847 = vunpack.c.h.b16 %v1094
    %v1848 = vunpack.c.l.b16 %v1095
    %v1849 = vunpack.c.h.b16 %v1095
    %v1850 = vunpack.c.l.b16 %v1096
    %v1851 = vunpack.c.h.b16 %v1096
    %v1852 = vunpack.c.l.b16 %v1097
    %v1853 = vunpack.c.h.b16 %v1097
    %v1854 = vunpack.c.l.b16 %v1098
    %v1855 = vunpack.c.h.b16 %v1098
    %v1856 = vunpack.c.l.b16 %v1099
    %v1857 = vunpack.c.h.b16 %v1099
    %v1858 = vunpack.c.l.b16 %v1100
    %v1859 = vunpack.c.h.b16 %v1100
    %v1860 = vunpack.c.l.b16 %v1101
    %v1861 = vunpack.c.h.b16 %v1101
    %v1862 = vunpack.c.l.b16 %v1102
    %v1863 = vunpack.c.h.b16 %v1102
    %v1864 = vunpack.c.l.b16 %v1103
    %v1865 = vunpack.c.h.b16 %v1103
    %v1866 = vunpack.c.l.b16 %v1104
    %v1867 = vunpack.c.h.b16 %v1104
    %v1868 = vunpack.c.l.b16 %v1105
    %v1869 = vunpack.c.h.b16 %v1105
    %v1870 = vunpack.c.l.b16 %v1106
    %v1871 = vunpack.c.h.b16 %v1106
    %v1872 = vunpack.c.l.b16 %v1107
    %v1873 = vunpack.c.h.b16 %v1107
    %v1874 = vunpack.c.l.b16 %v1108
    %v1875 = vunpack.c.h.b16 %v1108
    %v1876 = vunpack.c.l.b16 %v1109
    %v1877 = vunpack.c.h.b16 %v1109
    %v1878 = vunpack.c.l.b16 %v1110
    %v1879 = vunpack.c.h.b16 %v1110
    %v1880 = vunpack.c.l.b16 %v1111
    %v1881 = vunpack.c.h.b16 %v1111
    %v1882 = vunpack.c.l.b16 %v1112
    %v1883 = vunpack.c.h.b16 %v1112
    %v1884 = vunpack.c.l.b16 %v1113
    %v1885 = vunpack.c.h.b16 %v1113
    %v1886 = vunpack.c.l.b16 %v1114
    %v1887 = vunpack.c.h.b16 %v1114
    %v1888 = vunpack.c.l.b16 %v1115
    %v1889 = vunpack.c.h.b16 %v1115
    %v1890 = vunpack.c.l.b16 %v1116
    %v1891 = vunpack.c.h.b16 %v1116
    %v1892 = vunpack.c.l.b16 %v1117
    %v1893 = vunpack.c.h.b16 %v1117
    %v1894 = vunpack.c.l.b16 %v1118
    %v1895 = vunpack.c.h.b16 %v1118
    %v1896 = vunpack.c.l.b16 %v1119
    %v1897 = vunpack.c.h.b16 %v1119
    %v1898 = vunpack.c.l.b16 %v1120
    %v1899 = vunpack.c.h.b16 %v1120
    %v1900 = vunpack.c.l.b16 %v1121
    %v1901 = vunpack.c.h.b16 %v1121
    %v1902 = vunpack.c.l.b16 %v1122
    %v1903 = vunpack.c.h.b16 %v1122
    %v1904 = vunpack.c.l.b16 %v1123
    %v1905 = vunpack.c.h.b16 %v1123
    %v1906 = vunpack.c.l.b16 %v1124
    %v1907 = vunpack.c.h.b16 %v1124
    %v1908 = vunpack.c.l.b16 %v1125
    %v1909 = vunpack.c.h.b16 %v1125
    %v1910 = vunpack.c.l.b16 %v1126
    %v1911 = vunpack.c.h.b16 %v1126
    %v1912 = vunpack.c.l.b16 %v1127
    %v1913 = vunpack.c.h.b16 %v1127
    %v1914 = vunpack.c.l.b16 %v1128
    %v1915 = vunpack.c.h.b16 %v1128
    %v1916 = vunpack.c.l.b16 %v1129
    %v1917 = vunpack.c.h.b16 %v1129
    %v1918 = vunpack.c.l.b16 %v1130
    %v1919 = vunpack.c.h.b16 %v1130
    %v1920 = vunpack.c.l.b16 %v1131
    %v1921 = vunpack.c.h.b16 %v1131
    %v1922 = vunpack.c.l.b16 %v1132
    %v1923 = vunpack.c.h.b16 %v1132
    %v1924 = vunpack.c.l.b16 %v1133
    %v1925 = vunpack.c.h.b16 %v1133
    %v1926 = vunpack.c.l.b16 %v1134
    %v1927 = vunpack.c.h.b16 %v1134
    %v1928 = vunpack.c.l.b16 %v1135
    %v1929 = vunpack.c.h.b16 %v1135
    %v1930 = vunpack.c.l.b16 %v1136
    %v1931 = vunpack.c.h.b16 %v1136
    %v1932 = vunpack.c.l.b16 %v1137
    %v1933 = vunpack.c.h.b16 %v1137
    %v1934 = vunpack.c.l.b16 %v1138
    %v1935 = vunpack.c.h.b16 %v1138
    %v1936 = vunpack.c.l.b16 %v1139
    %v1937 = vunpack.c.h.b16 %v1139
    %v1938 = vunpack.c.l.b16 %v1140
    %v1939 = vunpack.c.h.b16 %v1140
    %v1940 = vunpack.c.l.b16 %v1141
    %v1941 = vunpack.c.h.b16 %v1141
    %v1942 = vunpack.c.l.b16 %v1142
    %v1943 = vunpack.c.h.b16 %v1142
    %v1944 = vunpack.c.l.b16 %v1143
    %v1945 = vunpack.c.h.b16 %v1143
    %v1946 = vunpack.c.l.b16 %v1144
    %v1947 = vunpack.c.h.b16 %v1144
    %v1948 = vunpack.c.l.b16 %v1145
    %v1949 = vunpack.c.h.b16 %v1145
    %v1950 = vunpack.c.l.b16 %v1146
    %v1951 = vunpack.c.h.b16 %v1146
    %v1952 = vunpack.c.l.b16 %v1147
    %v1953 = vunpack.c.h.b16 %v1147
    %v1954 = vunpack.c.l.b16 %v1148
    %v1955 = vunpack.c.h.b16 %v1148
    %v1956 = vunpack.c.l.b16 %v1149
    %v1957 = vunpack.c.h.b16 %v1149
    %v1958 = vunpack.c.l.b16 %v1150
    %v1959 = vunpack.c.h.b16 %v1150
    %v1960 = vunpack.c.l.b16 %v1151
    %v1961 = vunpack.c.h.b16 %v1151
    %v1962 = vunpack.c.l.b16 %v1152
    %v1963 = vunpack.c.h.b16 %v1152
    %v1964 = vunpack.c.l.b16 %v1153
    %v1965 = vunpack.c.h.b16 %v1153
    %v1966 = vunpack.c.l.b16 %v1154
    %v1967 = vunpack.c.h.b16 %v1154
    %v1968 = vunpack.c.l.b16 %v1155
    %v1969 = vunpack.c.h.b16 %v1155
    %v1970 = vunpack.c.l.b16 %v1156
    %v1971 = vunpack.c.h.b16 %v1156
    %v1972 = vunpack.c.l.b16 %v1157
    %v1973 = vunpack.c.h.b16 %v1157
    %v1974 = vunpack.c.l.b16 %v1158
    %v1975 = vunpack.c.h.b16 %v1158
    %v1976 = vunpack.c.l.b16 %v1159
    %v1977 = vunpack.c.h.b16 %v1159
    %v1978 = vunpack.c.l.b16 %v1160
    %v1979 = vunpack.c.h.b16 %v1160
    %v1980 = vunpack.c.l.b16 %v1161
    %v1981 = vunpack.c.h.b16 %v1161
    %v1982 = vunpack.c.l.b16 %v1162
    %v1983 = vunpack.c.h.b16 %v1162
    %v1984 = vunpack.c.l.b16 %v1163
    %v1985 = vunpack.c.h.b16 %v1163
    %v1986 = vunpack.c.l.b16 %v1164
    %v1987 = vunpack.c.h.b16 %v1164
    %v1988 = vunpack.c.l.b16 %v1165
    %v1989 = vunpack.c.h.b16 %v1165
    %v1990 = vunpack.c.l.b16 %v1166
    %v1991 = vunpack.c.h.b16 %v1166
    %v1992 = vunpack.c.l.b16 %v1167
    %v1993 = vunpack.c.h.b16 %v1167
    %v1994 = vunpack.c.l.b16 %v1168
    %v1995 = vunpack.c.h.b16 %v1168
    %v1996 = vunpack.c.l.b16 %v1169
    %v1997 = vunpack.c.h.b16 %v1169
    %v1998 = vunpack.c.l.b16 %v1170
    %v1999 = vunpack.c.h.b16 %v1170
    %v2000 = vunpack.c.l.b16 %v1171
    %v2001 = vunpack.c.h.b16 %v1171
    %v2002 = vunpack.c.l.b16 %v1172
    %v2003 = vunpack.c.h.b16 %v1172
    %v2004 = vunpack.c.l.b16 %v1173
    %v2005 = vunpack.c.h.b16 %v1173
    %v2006 = vunpack.c.l.b16 %v1174
    %v2007 = vunpack.c.h.b16 %v1174
    %v2008 = vunpack.c.l.b16 %v1175
    %v2009 = vunpack.c.h.b16 %v1175
    %v2010 = vunpack.c.l.b16 %v1176
    %v2011 = vunpack.c.h.b16 %v1176
    %v2012 = vunpack.c.l.b16 %v1177
    %v2013 = vunpack.c.h.b16 %v1177
    %v2014 = vunpack.c.l.b16 %v1178
    %v2015 = vunpack.c.h.b16 %v1178
    %v2016 = vunpack.c.l.b16 %v1179
    %v2017 = vunpack.c.h.b16 %v1179
    %v2018 = vunpack.c.l.b16 %v1180
    %v2019 = vunpack.c.h.b16 %v1180
    %v2020 = vunpack.c.l.b16 %v1181
    %v2021 = vunpack.c.h.b16 %v1181
    %v2022 = vunpack.c.l.b16 %v1182
    %v2023 = vunpack.c.h.b16 %v1182
    %v2024 = vunpack.c.l.b16 %v1183
    %v2025 = vunpack.c.h.b16 %v1183
    %v2026 = vunpack.c.l.b16 %v1184
    %v2027 = vunpack.c.h.b16 %v1184
    %v2028 = vunpack.c.l.b16 %v1185
    %v2029 = vunpack.c.h.b16 %v1185
    %v2030 = vunpack.c.l.b16 %v1186
    %v2031 = vunpack.c.h.b16 %v1186
    %v2032 = vunpack.c.l.b16 %v1187
    %v2033 = vunpack.c.h.b16 %v1187
    %v2034 = vunpack.c.l.b16 %v1188
    %v2035 = vunpack.c.h.b16 %v1188
    %v2036 = vunpack.c.l.b16 %v1189
    %v2037 = vunpack.c.h.b16 %v1189
    %v2038 = vunpack.c.l.b16 %v1190
    %v2039 = vunpack.c.h.b16 %v1190
    %v2040 = vunpack.c.l.b16 %v1191
    %v2041 = vunpack.c.h.b16 %v1191
    %v2042 = vunpack.c.l.b16 %v1192
    %v2043 = vunpack.c.h.b16 %v1192
    %v2044 = vunpack.c.l.b16 %v1193
    %v2045 = vunpack.c.h.b16 %v1193
    %v2046 = vunpack.c.l.b16 %v1194
    %v2047 = vunpack.c.h.b16 %v1194
    %v2048 = vunpack.c.l.b16 %v1195
    %v2049 = vunpack.c.h.b16 %v1195
    %v2050 = vunpack.c.l.b16 %v1196
    %v2051 = vunpack.c.h.b16 %v1196
    %v2052 = vunpack.c.l.b16 %v1197
    %v2053 = vunpack.c.h.b16 %v1197
    %v2054 = vunpack.c.l.b16 %v1198
    %v2055 = vunpack.c.h.b16 %v1198
    %v2056 = vunpack.c.l.b16 %v1199
    %v2057 = vunpack.c.h.b16 %v1199
    %v2058 = vunpack.c.l.b16 %v1200
    %v2059 = vunpack.c.h.b16 %v1200
    %v2060 = vunpack.c.l.b16 %v1201
    %v2061 = vunpack.c.h.b16 %v1201
    %v2062 = vunpack.c.l.b16 %v1202
    %v2063 = vunpack.c.h.b16 %v1202
    %v2064 = vunpack.c.l.b16 %v1203
    %v2065 = vunpack.c.h.b16 %v1203
    %v2066 = vunpack.c.l.b16 %v1204
    %v2067 = vunpack.c.h.b16 %v1204
    %v2068 = vunpack.c.l.b16 %v1205
    %v2069 = vunpack.c.h.b16 %v1205
    %v2070 = vunpack.c.l.b16 %v1206
    %v2071 = vunpack.c.h.b16 %v1206
    %v2072 = vunpack.c.l.b16 %v1207
    %v2073 = vunpack.c.h.b16 %v1207
    %v2074 = vunpack.c.l.b16 %v1208
    %v2075 = vunpack.c.h.b16 %v1208
    %v2076 = vunpack.c.l.b16 %v1209
    %v2077 = vunpack.c.h.b16 %v1209
    %v2078 = vunpack.c.l.b16 %v1210
    %v2079 = vunpack.c.h.b16 %v1210
    %v2080 = vunpack.c.l.b16 %v1211
    %v2081 = vunpack.c.h.b16 %v1211
    %v2082 = vunpack.c.l.b16 %v1212
    %v2083 = vunpack.c.h.b16 %v1212
    %v2084 = vunpack.c.l.b16 %v1213
    %v2085 = vunpack.c.h.b16 %v1213
    %v2086 = vunpack.c.l.b16 %v1214
    %v2087 = vunpack.c.h.b16 %v1214
    %v2088 = vunpack.c.l.b16 %v1215
    %v2089 = vunpack.c.h.b16 %v1215
    %v2090 = vunpack.c.l.b16 %v1216
    %v2091 = vunpack.c.h.b16 %v1216
    %v2092 = vunpack.c.l.b16 %v1217
    %v2093 = vunpack.c.h.b16 %v1217
    %v2094 = vunpack.c.l.b16 %v1218
    %v2095 = vunpack.c.h.b16 %v1218
    %v2096 = vunpack.c.l.b16 %v1219
    %v2097 = vunpack.c.h.b16 %v1219
    %v2098 = vunpack.c.l.b16 %v1220
    %v2099 = vunpack.c.h.b16 %v1220
    %v2100 = vunpack.c.l.b16 %v1221
    %v2101 = vunpack.c.h.b16 %v1221
    %v2102 = vunpack.c.l.b16 %v1222
    %v2103 = vunpack.c.h.b16 %v1222
    %v2104 = vunpack.c.l.b16 %v1223
    %v2105 = vunpack.c.h.b16 %v1223
    %v2106 = vunpack.c.l.b16 %v1224
    %v2107 = vunpack.c.h.b16 %v1224
    %v2108 = vunpack.c.l.b16 %v1225
    %v2109 = vunpack.c.h.b16 %v1225
    %v2110 = vunpack.c.l.b16 %v1226
    %v2111 = vunpack.c.h.b16 %v1226
    %v2112 = vunpack.c.l.b16 %v1227
    %v2113 = vunpack.c.h.b16 %v1227
    %v2114 = vunpack.c.l.b16 %v1228
    %v2115 = vunpack.c.h.b16 %v1228
    %v2116 = vunpack.c.l.b16 %v1229
    %v2117 = vunpack.c.h.b16 %v1229
    %v2118 = vunpack.c.l.b16 %v1230
    %v2119 = vunpack.c.h.b16 %v1230
    %v2120 = vunpack.c.l.b16 %v1231
    %v2121 = vunpack.c.h.b16 %v1231
    %v2122 = vunpack.c.l.b16 %v1232
    %v2123 = vunpack.c.h.b16 %v1232
    %v2124 = vunpack.c.l.b16 %v1233
    %v2125 = vunpack.c.h.b16 %v1233
    %v2126 = vunpack.c.l.b16 %v1234
    %v2127 = vunpack.c.h.b16 %v1234
    %v2128 = vunpack.c.l.b16 %v1235
    %v2129 = vunpack.c.h.b16 %v1235
    %v2130 = vunpack.c.l.b16 %v1236
    %v2131 = vunpack.c.h.b16 %v1236
    %v2132 = vunpack.c.l.b16 %v1237
    %v2133 = vunpack.c.h.b16 %v1237
    %v2134 = vpack.c.b16 %v1564, %v1558
    %v2135 = vpack.c.b16 %v1565, %v1559
    %v2136 = vpack.c.b16 %v1566, %v1560
    %v2137 = vpack.c.b16 %v1567, %v1561
    %v2138 = vpack.c.b16 %v1568, %v1562
    %v2139 = vpack.c.b16 %v1569, %v1563
    %v2140 = vpack.c.b16 %v1576, %v1570
    %v2141 = vpack.c.b16 %v1577, %v1571
    %v2142 = vpack.c.b16 %v1578, %v1572
    %v2143 = vpack.c.b16 %v1579, %v1573
    %v2144 = vpack.c.b16 %v1580, %v1574
    %v2145 = vpack.c.b16 %v1581, %v1575
    %v2146 = vpack.c.b16 %v1588, %v1582
    %v2147 = vpack.c.b16 %v1589, %v1583
    %v2148 = vpack.c.b16 %v1590, %v1584
    %v2149 = vpack.c.b16 %v1591, %v1585
    %v2150 = vpack.c.b16 %v1592, %v1586
    %v2151 = vpack.c.b16 %v1593, %v1587
    %v2152 = vpack.c.b16 %v1600, %v1594
    %v2153 = vpack.c.b16 %v1601, %v1595
    %v2154 = vpack.c.b16 %v1602, %v1596
    %v2155 = vpack.c.b16 %v1603, %v1597
    %v2156 = vpack.c.b16 %v1604, %v1598
    %v2157 = vpack.c.b16 %v1605, %v1599
    %v2158 = vpack.c.b16 %v1612, %v1606
    %v2159 = vpack.c.b16 %v1613, %v1607
    %v2160 = vpack.c.b16 %v1614, %v1608
    %v2161 = vpack.c.b16 %v1615, %v1609
    %v2162 = vpack.c.b16 %v1616, %v1610
    %v2163 = vpack.c.b16 %v1617, %v1611
    %v2164 = vpack.c.b16 %v1624, %v1618
    %v2165 = vpack.c.b16 %v1625, %v1619
    %v2166 = vpack.c.b16 %v1626, %v1620
    %v2167 = vpack.c.b16 %v1627, %v1621
    %v2168 = vpack.c.b16 %v1628, %v1622
    %v2169 = vpack.c.b16 %v1629, %v1623
    %v2170 = vpack.c.b16 %v1636, %v1630
    %v2171 = vpack.c.b16 %v1637, %v1631
    %v2172 = vpack.c.b16 %v1638, %v1632
    %v2173 = vpack.c.b16 %v1639, %v1633
    %v2174 = vpack.c.b16 %v1640, %v1634
    %v2175 = vpack.c.b16 %v1641, %v1635
    %v2176 = vpack.c.b16 %v1648, %v1642
    %v2177 = vpack.c.b16 %v1649, %v1643
    %v2178 = vpack.c.b16 %v1650, %v1644
    %v2179 = vpack.c.b16 %v1651, %v1645
    %v2180 = vpack.c.b16 %v1652, %v1646
    %v2181 = vpack.c.b16 %v1653, %v1647
    %v2182 = vpack.c.b16 %v1660, %v1654
    %v2183 = vpack.c.b16 %v1661, %v1655
    %v2184 = vpack.c.b16 %v1662, %v1656
    %v2185 = vpack.c.b16 %v1663, %v1657
    %v2186 = vpack.c.b16 %v1664, %v1658
    %v2187 = vpack.c.b16 %v1665, %v1659
    %v2188 = vpack.c.b16 %v1672, %v1666
    %v2189 = vpack.c.b16 %v1673, %v1667
    %v2190 = vpack.c.b16 %v1674, %v1668
    %v2191 = vpack.c.b16 %v1675, %v1669
    %v2192 = vpack.c.b16 %v1676, %v1670
    %v2193 = vpack.c.b16 %v1677, %v1671
    %v2194 = vpack.c.b16 %v1684, %v1678
    %v2195 = vpack.c.b16 %v1685, %v1679
    %v2196 = vpack.c.b16 %v1686, %v1680
    %v2197 = vpack.c.b16 %v1687, %v1681
    %v2198 = vpack.c.b16 %v1688, %v1682
    %v2199 = vpack.c.b16 %v1689, %v1683
    %v2200 = vpack.c.b16 %v1696, %v1690
    %v2201 = vpack.c.b16 %v1697, %v1691
    %v2202 = vpack.c.b16 %v1698, %v1692
    %v2203 = vpack.c.b16 %v1699, %v1693
    %v2204 = vpack.c.b16 %v1700, %v1694
    %v2205 = vpack.c.b16 %v1701, %v1695
    %v2206 = vpack.c.b16 %v1708, %v1702
    %v2207 = vpack.c.b16 %v1709, %v1703
    %v2208 = vpack.c.b16 %v1710, %v1704
    %v2209 = vpack.c.b16 %v1711, %v1705
    %v2210 = vpack.c.b16 %v1712, %v1706
    %v2211 = vpack.c.b16 %v1713, %v1707
    %v2212 = vpack.c.b16 %v1720, %v1714
    %v2213 = vpack.c.b16 %v1721, %v1715
    %v2214 = vpack.c.b16 %v1722, %v1716
    %v2215 = vpack.c.b16 %v1723, %v1717
    %v2216 = vpack.c.b16 %v1724, %v1718
    %v2217 = vpack.c.b16 %v1725, %v1719
    %v2218 = vpack.c.b16 %v1732, %v1726
    %v2219 = vpack.c.b16 %v1733, %v1727
    %v2220 = vpack.c.b16 %v1734, %v1728
    %v2221 = vpack.c.b16 %v1735, %v1729
    %v2222 = vpack.c.b16 %v1736, %v1730
    %v2223 = vpack.c.b16 %v1737, %v1731
    %v2224 = vpack.c.b16 %v1744, %v1738
    %v2225 = vpack.c.b16 %v1745, %v1739
    %v2226 = vpack.c.b16 %v1746, %v1740
    %v2227 = vpack.c.b16 %v1747, %v1741
    %v2228 = vpack.c.b16 %v1748, %v1742
    %v2229 = vpack.c.b16 %v1749, %v1743
    %v2230 = vpack.c.b16 %v1756, %v1750
    %v2231 = vpack.c.b16 %v1757, %v1751
    %v2232 = vpack.c.b16 %v1758, %v1752
    %v2233 = vpack.c.b16 %v1759, %v1753
    %v2234 = vpack.c.b16 %v1760, %v1754
    %v2235 = vpack.c.b16 %v1761, %v1755
    %v2236 = vpack.c.b16 %v1768, %v1762
    %v2237 = vpack.c.b16 %v1769, %v1763
    %v2238 = vpack.c.b16 %v1770, %v1764
    %v2239 = vpack.c.b16 %v1771, %v1765
    %v2240 = vpack.c.b16 %v1772, %v1766
    %v2241 = vpack.c.b16 %v1773, %v1767
    %v2242 = vpack.c.b16 %v1780, %v1774
    %v2243 = vpack.c.b16 %v1781, %v1775
    %v2244 = vpack.c.b16 %v1782, %v1776
    %v2245 = vpack.c.b16 %v1783, %v1777
    %v2246 = vpack.c.b16 %v1784, %v1778
    %v2247 = vpack.c.b16 %v1785, %v1779
    %v2248 = vpack.c.b16 %v1792, %v1786
    %v2249 = vpack.c.b16 %v1793, %v1787
    %v2250 = vpack.c.b16 %v1794, %v1788
    %v2251 = vpack.c.b16 %v1795, %v1789
    %v2252 = vpack.c.b16 %v1796, %v1790
    %v2253 = vpack.c.b16 %v1797, %v1791
    %v2254 = vpack.c.b16 %v1804, %v1798
    %v2255 = vpack.c.b16 %v1805, %v1799
    %v2256 = vpack.c.b16 %v1806, %v1800
    %v2257 = vpack.c.b16 %v1807, %v1801
    %v2258 = vpack.c.b16 %v1808, %v1802
    %v2259 = vpack.c.b16 %v1809, %v1803
    %v2260 = vpack.c.b16 %v1816, %v1810
    %v2261 = vpack.c.b16 %v1817, %v1811
    %v2262 = vpack.c.b16 %v1818, %v1812
    %v2263 = vpack.c.b16 %v1819, %v1813
    %v2264 = vpack.c.b16 %v1820, %v1814
    %v2265 = vpack.c.b16 %v1821, %v1815
    %v2266 = vpack.c.b16 %v1828, %v1822
    %v2267 = vpack.c.b16 %v1829, %v1823
    %v2268 = vpack.c.b16 %v1830, %v1824
    %v2269 = vpack.c.b16 %v1831, %v1825
    %v2270 = vpack.c.b16 %v1832, %v1826
    %v2271 = vpack.c.b16 %v1833, %v1827
    %v2272 = vpack.c.b16 %v1840, %v1834
    %v2273 = vpack.c.b16 %v1841, %v1835
    %v2274 = vpack.c.b16 %v1842, %v1836
    %v2275 = vpack.c.b16 %v1843, %v1837
    %v2276 = vpack.c.b16 %v1844, %v1838
    %v2277 = vpack.c.b16 %v1845, %v1839
    %v2278 = vpack.c.b16 %v1852, %v1846
    %v2279 = vpack.c.b16 %v1853, %v1847
    %v2280 = vpack.c.b16 %v1854, %v1848
    %v2281 = vpack.c.b16 %v1855, %v1849
    %v2282 = vpack.c.b16 %v1856, %v1850
    %v2283 = vpack.c.b16 %v1857, %v1851
    %v2284 = vpack.c.b16 %v1864, %v1858
    %v2285 = vpack.c.b16 %v1865, %v1859
    %v2286 = vpack.c.b16 %v1866, %v1860
    %v2287 = vpack.c.b16 %v1867, %v1861
    %v2288 = vpack.c.b16 %v1868, %v1862
    %v2289 = vpack.c.b16 %v1869, %v1863
    %v2290 = vpack.c.b16 %v1876, %v1870
    %v2291 = vpack.c.b16 %v1877, %v1871
    %v2292 = vpack.c.b16 %v1878, %v1872
    %v2293 = vpack.c.b16 %v1879, %v1873
    %v2294 = vpack.c.b16 %v1880, %v1874
    %v2295 = vpack.c.b16 %v1881, %v1875
    %v2296 = vpack.c.b16 %v1888, %v1882
    %v2297 = vpack.c.b16 %v1889, %v1883
    %v2298 = vpack.c.b16 %v1890, %v1884
    %v2299 = vpack.c.b16 %v1891, %v1885
    %v2300 = vpack.c.b16 %v1892, %v1886
    %v2301 = vpack.c.b16 %v1893, %v1887
    %v2302 = vpack.c.b16 %v1900, %v1894
    %v2303 = vpack.c.b16 %v1901, %v1895
    %v2304 = vpack.c.b16 %v1902, %v1896
    %v2305 = vpack.c.b16 %v1903, %v1897
    %v2306 = vpack.c.b16 %v1904, %v1898
    %v2307 = vpack.c.b16 %v1905, %v1899
    %v2308 = vpack.c.b16 %v1912, %v1906
    %v2309 = vpack.c.b16 %v1913, %v1907
    %v2310 = vpack.c.b16 %v1914, %v1908
    %v2311 = vpack.c.b16 %v1915, %v1909
    %v2312 = vpack.c.b16 %v1916, %v1910
    %v2313 = vpack.c.b16 %v1917, %v1911
    %v2314 = vpack.c.b16 %v1924, %v1918
    %v2315 = vpack.c.b16 %v1925, %v1919
    %v2316 = vpack.c.b16 %v1926, %v1920
    %v2317 = vpack.c.b16 %v1927, %v1921
    %v2318 = vpack.c.b16 %v1928, %v1922
    %v2319 = vpack.c.b16 %v1929, %v1923
    %v2320 = vpack.c.b16 %v1936, %v1930
    %v2321 = vpack.c.b16 %v1937, %v1931
    %v2322 = vpack.c.b16 %v1938, %v1932
    %v2323 = vpack.c.b16 %v1939, %v1933
    %v2324 = vpack.c.b16 %v1940, %v1934
    %v2325 = vpack.c.b16 %v1941, %v1935
    %v2326 = vpack.c.b16 %v1948, %v1942
    %v2327 = vpack.c.b16 %v1949, %v1943
    %v2328 = vpack.c.b16 %v1950, %v1944
    %v2329 = vpack.c.b16 %v1951, %v1945
    %v2330 = vpack.c.b16 %v1952, %v1946
    %v2331 = vpack.c.b16 %v1953, %v1947
    %v2332 = vpack.c.b16 %v1960, %v1954
    %v2333 = vpack.c.b16 %v1961, %v1955
    %v2334 = vpack.c.b16 %v1962, %v1956
    %v2335 = vpack.c.b16 %v1963, %v1957
    %v2336 = vpack.c.b16 %v1964, %v1958
    %v2337 = vpack.c.b16 %v1965, %v1959
    %v2338 = vpack.c.b16 %v1972, %v1966
    %v2339 = vpack.c.b16 %v1973, %v1967
    %v2340 = vpack.c.b16 %v1974, %v1968
    %v2341 = vpack.c.b16 %v1975, %v1969
    %v2342 = vpack.c.b16 %v1976, %v1970
    %v2343 = vpack.c.b16 %v1977, %v1971
    %v2344 = vpack.c.b16 %v1984, %v1978
    %v2345 = vpack.c.b16 %v1985, %v1979
    %v2346 = vpack.c.b16 %v1986, %v1980
    %v2347 = vpack.c.b16 %v1987, %v1981
    %v2348 = vpack.c.b16 %v1988, %v1982
    %v2349 = vpack.c.b16 %v1989, %v1983
    %v2350 = vpack.c.b16 %v1996, %v1990
    %v2351 = vpack.c.b16 %v1997, %v1991
    %v2352 = vpack.c.b16 %v1998, %v1992
    %v2353 = vpack.c.b16 %v1999, %v1993
    %v2354 = vpack.c.b16 %v2000, %v1994
    %v2355 = vpack.c.b16 %v2001, %v1995
    %v2356 = vpack.c.b16 %v2008, %v2002
    %v2357 = vpack.c.b16 %v2009, %v2003
    %v2358 = vpack.c.b16 %v2010, %v2004
    %v2359 = vpack.c.b16 %v2011, %v2005
    %v2360 = vpack.c.b16 %v2012, %v2006
    %v2361 = vpack.c.b16 %v2013, %v2007
    %v2362 = vpack.c.b16 %v2020, %v2014
    %v2363 = vpack.c.b16 %v2021, %v2015
    %v2364 = vpack.c.b16 %v2022, %v2016
    %v2365 = vpack.c.b16 %v2023, %v2017
    %v2366 = vpack.c.b16 %v2024, %v2018
    %v2367 = vpack.c.b16 %v2025, %v2019
    %v2368 = vpack.c.b16 %v2032, %v2026
    %v2369 = vpack.c.b16 %v2033, %v2027
    %v2370 = vpack.c.b16 %v2034, %v2028
    %v2371 = vpack.c.b16 %v2035, %v2029
    %v2372 = vpack.c.b16 %v2036, %v2030
    %v2373 = vpack.c.b16 %v2037, %v2031
    %v2374 = vpack.c.b16 %v2044, %v2038
    %v2375 = vpack.c.b16 %v2045, %v2039
    %v2376 = vpack.c.b16 %v2046, %v2040
    %v2377 = vpack.c.b16 %v2047, %v2041
    %v2378 = vpack.c.b16 %v2048, %v2042
    %v2379 = vpack.c.b16 %v2049, %v2043
    %v2380 = vpack.c.b16 %v2056, %v2050
    %v2381 = vpack.c.b16 %v2057, %v2051
    %v2382 = vpack.c.b16 %v2058, %v2052
    %v2383 = vpack.c.b16 %v2059, %v2053
    %v2384 = vpack.c.b16 %v2060, %v2054
    %v2385 = vpack.c.b16 %v2061, %v2055
    %v2386 = vpack.c.b16 %v2068, %v2062
    %v2387 = vpack.c.b16 %v2069, %v2063
    %v2388 = vpack.c.b16 %v2070, %v2064
    %v2389 = vpack.c.b16 %v2071, %v2065
    %v2390 = vpack.c.b16 %v2072, %v2066
    %v2391 = vpack.c.b16 %v2073, %v2067
    %v2392 = vpack.c.b16 %v2080, %v2074
    %v2393 = vpack.c.b16 %v2081, %v2075
    %v2394 = vpack.c.b16 %v2082, %v2076
    %v2395 = vpack.c.b16 %v2083, %v2077
    %v2396 = vpack.c.b16 %v2084, %v2078
    %v2397 = vpack.c.b16 %v2085, %v2079
    %v2398 = vpack.c.b16 %v2092, %v2086
    %v2399 = vpack.c.b16 %v2093, %v2087
    %v2400 = vpack.c.b16 %v2094, %v2088
    %v2401 = vpack.c.b16 %v2095, %v2089
    %v2402 = vpack.c.b16 %v2096, %v2090
    %v2403 = vpack.c.b16 %v2097, %v2091
    %v2404 = vpack.c.b16 %v2104, %v2098
    %v2405 = vpack.c.b16 %v2105, %v2099
    %v2406 = vpack.c.b16 %v2106, %v2100
    %v2407 = vpack.c.b16 %v2107, %v2101
    %v2408 = vpack.c.b16 %v2108, %v2102
    %v2409 = vpack.c.b16 %v2109, %v2103
    %v2410 = vpack.c.b16 %v2116, %v2110
    %v2411 = vpack.c.b16 %v2117, %v2111
    %v2412 = vpack.c.b16 %v2118, %v2112
    %v2413 = vpack.c.b16 %v2119, %v2113
    %v2414 = vpack.c.b16 %v2120, %v2114
    %v2415 = vpack.c.b16 %v2121, %v2115
    %v2416 = vpack.c.b16 %v2128, %v2122
    %v2417 = vpack.c.b16 %v2129, %v2123
    %v2418 = vpack.c.b16 %v2130, %v2124
    %v2419 = vpack.c.b16 %v2131, %v2125
    %v2420 = vpack.c.b16 %v2132, %v2126
    %v2421 = vpack.c.b16 %v2133, %v2127
    %2710 = vmatprep.subr.bf16.mxu0 %v2135
    %2711 = vmatpush1.bf16.msra.mxu0 %v2134
    %2712 = vmatprep.subr.bf16.mxu0 %v2141
    %2713 = vmatpush1.bf16.msra.mxu0 %v2140
    %2714 = vmatprep.subr.bf16.mxu0 %v2147
    %2715 = vmatpush1.bf16.msra.mxu0 %v2146
    %2716 = vmatprep.subr.bf16.mxu0 %v2153
    %2717 = vmatpush1.bf16.msra.mxu0 %v2152
    %2718 = vmatprep.subr.bf16.mxu0 %v2159
    %2719 = vmatpush1.bf16.msra.mxu0 %v2158
    %2720 = vmatprep.subr.bf16.mxu0 %v2165
    %2721 = vmatpush1.bf16.msra.mxu0 %v2164
    %2722 = vmatprep.subr.bf16.mxu0 %v2171
    %2723 = vmatpush1.bf16.msra.mxu0 %v2170
    %2724 = vmatprep.subr.bf16.mxu0 %v2177
    %2725 = vmatpush1.bf16.msra.mxu0 %v2176
    %2726 = vmatprep.subr.bf16.mxu0 %v2183
    %2727 = vmatpush1.bf16.msra.mxu0 %v2182
    %2728 = vmatprep.subr.bf16.mxu0 %v2189
    %2729 = vmatpush1.bf16.msra.mxu0 %v2188
    %2730 = vmatprep.subr.bf16.mxu0 %v2195
    %2731 = vmatpush1.bf16.msra.mxu0 %v2194
    %2732 = vmatprep.subr.bf16.mxu0 %v2201
    %2733 = vmatpush1.bf16.msra.mxu0 %v2200
    %2734 = vmatprep.subr.bf16.mxu0 %v2207
    %2735 = vmatpush1.bf16.msra.mxu0 %v2206
    %2736 = vmatprep.subr.bf16.mxu0 %v2213
    %2737 = vmatpush1.bf16.msra.mxu0 %v2212
    %2738 = vmatprep.subr.bf16.mxu0 %v2219
    %2739 = vmatpush1.bf16.msra.mxu0 %v2218
    %2740 = vmatprep.subr.bf16.mxu0 %v2225
    %2741 = vmatpush1.bf16.msra.mxu0 %v2224
    %2742 = vmatprep.mubr.bf16.mxu0 %v945
    %2743 = vmatmul.mubr.bf16.gmra.mrb[0].mxu0 %v944
    %v2744 = vpop.f32.mrb[0].mxu0
    %v2745 = vadd.f32 %v1243, %v2744
    %v2746 = vpop.f32.mrb[0].mxu0
    %v2747 = vadd.f32 %v1247, %v2746
    %v2748 = vpop.f32.mrb[0].mxu0
    %v2749 = vpop.f32.mrb[0].mxu0
    %2750 = vdwg.mxu0
    %2751 = vmatprep.subr.bf16.mxu0 %v2231
    %2752 = vmatpush1.bf16.msra.mxu0 %v2230
    %2753 = vmatprep.subr.bf16.mxu0 %v2237
    %2754 = vmatpush1.bf16.msra.mxu0 %v2236
    %2755 = vmatprep.subr.bf16.mxu0 %v2243
    %2756 = vmatpush1.bf16.msra.mxu0 %v2242
    %2757 = vmatprep.subr.bf16.mxu0 %v2249
    %2758 = vmatpush1.bf16.msra.mxu0 %v2248
    %2759 = vmatprep.subr.bf16.mxu0 %v2255
    %2760 = vmatpush1.bf16.msra.mxu0 %v2254
    %2761 = vmatprep.subr.bf16.mxu0 %v2261
    %2762 = vmatpush1.bf16.msra.mxu0 %v2260
    %2763 = vmatprep.subr.bf16.mxu0 %v2267
    %2764 = vmatpush1.bf16.msra.mxu0 %v2266
    %2765 = vmatprep.subr.bf16.mxu0 %v2273
    %2766 = vmatpush1.bf16.msra.mxu0 %v2272
    %2767 = vmatprep.subr.bf16.mxu0 %v2279
    %2768 = vmatpush1.bf16.msra.mxu0 %v2278
    %2769 = vmatprep.subr.bf16.mxu0 %v2285
    %2770 = vmatpush1.bf16.msra.mxu0 %v2284
    %2771 = vmatprep.subr.bf16.mxu0 %v2291
    %2772 = vmatpush1.bf16.msra.mxu0 %v2290
    %2773 = vmatprep.subr.bf16.mxu0 %v2297
    %2774 = vmatpush1.bf16.msra.mxu0 %v2296
    %2775 = vmatprep.subr.bf16.mxu0 %v2303
    %2776 = vmatpush1.bf16.msra.mxu0 %v2302
    %2777 = vmatprep.subr.bf16.mxu0 %v2309
    %2778 = vmatpush1.bf16.msra.mxu0 %v2308
    %2779 = vmatprep.subr.bf16.mxu0 %v2315
    %2780 = vmatpush1.bf16.msra.mxu0 %v2314
    %2781 = vmatprep.subr.bf16.mxu0 %v2321
    %2782 = vmatpush1.bf16.msra.mxu0 %v2320
    %2783 = vmatprep.mubr.bf16.mxu0 %v947
    %2784 = vmatmul.mubr.bf16.gmra.mrb[0].mxu0 %v946
    %v2785 = vpop.f32.mrb[0].mxu0
    %v2786 = vadd.f32 %v2745, %v2785
    %v2787 = vpop.f32.mrb[0].mxu0
    %v2788 = vadd.f32 %v2747, %v2787
    %v2789 = vpop.f32.mrb[0].mxu0
    %v2790 = vpop.f32.mrb[0].mxu0
    %2791 = vdwg.mxu0
    %2792 = vmatprep.subr.bf16.mxu0 %v2327
    %2793 = vmatpush1.bf16.msra.mxu0 %v2326
    %2794 = vmatprep.subr.bf16.mxu0 %v2333
    %2795 = vmatpush1.bf16.msra.mxu0 %v2332
    %2796 = vmatprep.subr.bf16.mxu0 %v2339
    %2797 = vmatpush1.bf16.msra.mxu0 %v2338
    %2798 = vmatprep.subr.bf16.mxu0 %v2345
    %2799 = vmatpush1.bf16.msra.mxu0 %v2344
    %2800 = vmatprep.subr.bf16.mxu0 %v2351
    %2801 = vmatpush1.bf16.msra.mxu0 %v2350
    %2802 = vmatprep.subr.bf16.mxu0 %v2357
    %2803 = vmatpush1.bf16.msra.mxu0 %v2356
    %2804 = vmatprep.subr.bf16.mxu0 %v2363
    %2805 = vmatpush1.bf16.msra.mxu0 %v2362
    %2806 = vmatprep.subr.bf16.mxu0 %v2369
    %2807 = vmatpush1.bf16.msra.mxu0 %v2368
    %2808 = vmatprep.subr.bf16.mxu0 %v2375
    %2809 = vmatpush1.bf16.msra.mxu0 %v2374
    %2810 = vmatprep.subr.bf16.mxu0 %v2381
    %2811 = vmatpush1.bf16.msra.mxu0 %v2380
    %2812 = vmatprep.subr.bf16.mxu0 %v2387
    %2813 = vmatpush1.bf16.msra.mxu0 %v2386
    %2814 = vmatprep.subr.bf16.mxu0 %v2393
    %2815 = vmatpush1.bf16.msra.mxu0 %v2392
    %2816 = vmatprep.subr.bf16.mxu0 %v2399
    %2817 = vmatpush1.bf16.msra.mxu0 %v2398
    %2818 = vmatprep.subr.bf16.mxu0 %v2405
    %2819 = vmatpush1.bf16.msra.mxu0 %v2404
    %2820 = vmatprep.subr.bf16.mxu0 %v2411
    %2821 = vmatpush1.bf16.msra.mxu0 %v2410
    %2822 = vmatprep.subr.bf16.mxu0 %v2417
    %2823 = vmatpush1.bf16.msra.mxu0 %v2416
    %2824 = vmatprep.mubr.bf16.mxu0 %v949
    %2825 = vmatmul.mubr.bf16.gmra.mrb[0].mxu0 %v948
    %v2826 = vpop.f32.mrb[0].mxu0
    %v2827 = vadd.f32 %v2786, %v2826
    %v2828 = vpop.f32.mrb[0].mxu0
    %v2829 = vadd.f32 %v2788, %v2828
    %v2830 = vpop.f32.mrb[0].mxu0
    %v2831 = vpop.f32.mrb[0].mxu0
    %2832 = vdwg.mxu0
    %2833 = vmatprep.subr.bf16.mxu0 %v2137
    %2834 = vmatpush1.bf16.msra.mxu0 %v2136
    %2835 = vmatprep.subr.bf16.mxu0 %v2143
    %2836 = vmatpush1.bf16.msra.mxu0 %v2142
    %2837 = vmatprep.subr.bf16.mxu0 %v2149
    %2838 = vmatpush1.bf16.msra.mxu0 %v2148
    %2839 = vmatprep.subr.bf16.mxu0 %v2155
    %2840 = vmatpush1.bf16.msra.mxu0 %v2154
    %2841 = vmatprep.subr.bf16.mxu0 %v2161
    %2842 = vmatpush1.bf16.msra.mxu0 %v2160
    %2843 = vmatprep.subr.bf16.mxu0 %v2167
    %2844 = vmatpush1.bf16.msra.mxu0 %v2166
    %2845 = vmatprep.subr.bf16.mxu0 %v2173
    %2846 = vmatpush1.bf16.msra.mxu0 %v2172
    %2847 = vmatprep.subr.bf16.mxu0 %v2179
    %2848 = vmatpush1.bf16.msra.mxu0 %v2178
    %2849 = vmatprep.subr.bf16.mxu0 %v2185
    %2850 = vmatpush1.bf16.msra.mxu0 %v2184
    %2851 = vmatprep.subr.bf16.mxu0 %v2191
    %2852 = vmatpush1.bf16.msra.mxu0 %v2190
    %2853 = vmatprep.subr.bf16.mxu0 %v2197
    %2854 = vmatpush1.bf16.msra.mxu0 %v2196
    %2855 = vmatprep.subr.bf16.mxu0 %v2203
    %2856 = vmatpush1.bf16.msra.mxu0 %v2202
    %2857 = vmatprep.subr.bf16.mxu0 %v2209
    %2858 = vmatpush1.bf16.msra.mxu0 %v2208
    %2859 = vmatprep.subr.bf16.mxu0 %v2215
    %2860 = vmatpush1.bf16.msra.mxu0 %v2214
    %2861 = vmatprep.subr.bf16.mxu0 %v2221
    %2862 = vmatpush1.bf16.msra.mxu0 %v2220
    %2863 = vmatprep.subr.bf16.mxu0 %v2227
    %2864 = vmatpush1.bf16.msra.mxu0 %v2226
    %2865 = vmatprep.mubr.bf16.mxu0 %v945
    %2866 = vmatmul.mubr.bf16.gmra.mrb[0].mxu0 %v944
    %v2867 = vpop.f32.mrb[0].mxu0
    %v2868 = vadd.f32 %v1251, %v2867
    %v2869 = vpop.f32.mrb[0].mxu0
    %v2870 = vadd.f32 %v1255, %v2869
    %v2871 = vpop.f32.mrb[0].mxu0
    %v2872 = vpop.f32.mrb[0].mxu0
    %2873 = vdwg.mxu0
    %2874 = vmatprep.subr.bf16.mxu0 %v2233
    %2875 = vmatpush1.bf16.msra.mxu0 %v2232
    %2876 = vmatprep.subr.bf16.mxu0 %v2239
    %2877 = vmatpush1.bf16.msra.mxu0 %v2238
    %2878 = vmatprep.subr.bf16.mxu0 %v2245
    %2879 = vmatpush1.bf16.msra.mxu0 %v2244
    %2880 = vmatprep.subr.bf16.mxu0 %v2251
    %2881 = vmatpush1.bf16.msra.mxu0 %v2250
    %2882 = vmatprep.subr.bf16.mxu0 %v2257
    %2883 = vmatpush1.bf16.msra.mxu0 %v2256
    %2884 = vmatprep.subr.bf16.mxu0 %v2263
    %2885 = vmatpush1.bf16.msra.mxu0 %v2262
    %2886 = vmatprep.subr.bf16.mxu0 %v2269
    %2887 = vmatpush1.bf16.msra.mxu0 %v2268
    %2888 = vmatprep.subr.bf16.mxu0 %v2275
    %2889 = vmatpush1.bf16.msra.mxu0 %v2274
    %2890 = vmatprep.subr.bf16.mxu0 %v2281
    %2891 = vmatpush1.bf16.msra.mxu0 %v2280
    %2892 = vmatprep.subr.bf16.mxu0 %v2287
    %2893 = vmatpush1.bf16.msra.mxu0 %v2286
    %2894 = vmatprep.subr.bf16.mxu0 %v2293
    %2895 = vmatpush1.bf16.msra.mxu0 %v2292
    %2896 = vmatprep.subr.bf16.mxu0 %v2299
    %2897 = vmatpush1.bf16.msra.mxu0 %v2298
    %2898 = vmatprep.subr.bf16.mxu0 %v2305
    %2899 = vmatpush1.bf16.msra.mxu0 %v2304
    %2900 = vmatprep.subr.bf16.mxu0 %v2311
    %2901 = vmatpush1.bf16.msra.mxu0 %v2310
    %2902 = vmatprep.subr.bf16.mxu0 %v2317
    %2903 = vmatpush1.bf16.msra.mxu0 %v2316
    %2904 = vmatprep.subr.bf16.mxu0 %v2323
    %2905 = vmatpush1.bf16.msra.mxu0 %v2322
    %2906 = vmatprep.mubr.bf16.mxu0 %v947
    %2907 = vmatmul.mubr.bf16.gmra.mrb[0].mxu0 %v946
    %v2908 = vpop.f32.mrb[0].mxu0
    %v2909 = vadd.f32 %v2868, %v2908
    %v2910 = vpop.f32.mrb[0].mxu0
    %v2911 = vadd.f32 %v2870, %v2910
    %v2912 = vpop.f32.mrb[0].mxu0
    %v2913 = vpop.f32.mrb[0].mxu0
    %2914 = vdwg.mxu0
    %2915 = vmatprep.subr.bf16.mxu0 %v2329
    %2916 = vmatpush1.bf16.msra.mxu0 %v2328
    %2917 = vmatprep.subr.bf16.mxu0 %v2335
    %2918 = vmatpush1.bf16.msra.mxu0 %v2334
    %2919 = vmatprep.subr.bf16.mxu0 %v2341
    %2920 = vmatpush1.bf16.msra.mxu0 %v2340
    %2921 = vmatprep.subr.bf16.mxu0 %v2347
    %2922 = vmatpush1.bf16.msra.mxu0 %v2346
    %2923 = vmatprep.subr.bf16.mxu0 %v2353
    %2924 = vmatpush1.bf16.msra.mxu0 %v2352
    %2925 = vmatprep.subr.bf16.mxu0 %v2359
    %2926 = vmatpush1.bf16.msra.mxu0 %v2358
    %2927 = vmatprep.subr.bf16.mxu0 %v2365
    %2928 = vmatpush1.bf16.msra.mxu0 %v2364
    %2929 = vmatprep.subr.bf16.mxu0 %v2371
    %2930 = vmatpush1.bf16.msra.mxu0 %v2370
    %2931 = vmatprep.subr.bf16.mxu0 %v2377
    %2932 = vmatpush1.bf16.msra.mxu0 %v2376
    %2933 = vmatprep.subr.bf16.mxu0 %v2383
    %2934 = vmatpush1.bf16.msra.mxu0 %v2382
    %2935 = vmatprep.subr.bf16.mxu0 %v2389
    %2936 = vmatpush1.bf16.msra.mxu0 %v2388
    %2937 = vmatprep.subr.bf16.mxu0 %v2395
    %2938 = vmatpush1.bf16.msra.mxu0 %v2394
    %2939 = vmatprep.subr.bf16.mxu0 %v2401
    %2940 = vmatpush1.bf16.msra.mxu0 %v2400
    %2941 = vmatprep.subr.bf16.mxu0 %v2407
    %2942 = vmatpush1.bf16.msra.mxu0 %v2406
    %2943 = vmatprep.subr.bf16.mxu0 %v2413
    %2944 = vmatpush1.bf16.msra.mxu0 %v2412
    %2945 = vmatprep.subr.bf16.mxu0 %v2419
    %2946 = vmatpush1.bf16.msra.mxu0 %v2418
    %2947 = vmatprep.mubr.bf16.mxu0 %v949
    %2948 = vmatmul.mubr.bf16.gmra.mrb[0].mxu0 %v948
    %v2949 = vpop.f32.mrb[0].mxu0
    %v2950 = vadd.f32 %v2909, %v2949
    %v2951 = vpop.f32.mrb[0].mxu0
    %v2952 = vadd.f32 %v2911, %v2951
    %v2953 = vpop.f32.mrb[0].mxu0
    %v2954 = vpop.f32.mrb[0].mxu0
    %2955 = vdwg.mxu0
    %2956 = vmatprep.subr.bf16.mxu0 %v2139
    %2957 = vmatpush1.bf16.msra.mxu0 %v2138
    %2958 = vmatprep.subr.bf16.mxu0 %v2145
    %2959 = vmatpush1.bf16.msra.mxu0 %v2144
    %2960 = vmatprep.subr.bf16.mxu0 %v2151
    %2961 = vmatpush1.bf16.msra.mxu0 %v2150
    %2962 = vmatprep.subr.bf16.mxu0 %v2157
    %2963 = vmatpush1.bf16.msra.mxu0 %v2156
    %2964 = vmatprep.subr.bf16.mxu0 %v2163
    %2965 = vmatpush1.bf16.msra.mxu0 %v2162
    %2966 = vmatprep.subr.bf16.mxu0 %v2169
    %2967 = vmatpush1.bf16.msra.mxu0 %v2168
    %2968 = vmatprep.subr.bf16.mxu0 %v2175
    %2969 = vmatpush1.bf16.msra.mxu0 %v2174
    %2970 = vmatprep.subr.bf16.mxu0 %v2181
    %2971 = vmatpush1.bf16.msra.mxu0 %v2180
    %2972 = vmatprep.subr.bf16.mxu0 %v2187
    %2973 = vmatpush1.bf16.msra.mxu0 %v2186
    %2974 = vmatprep.subr.bf16.mxu0 %v2193
    %2975 = vmatpush1.bf16.msra.mxu0 %v2192
    %2976 = vmatprep.subr.bf16.mxu0 %v2199
    %2977 = vmatpush1.bf16.msra.mxu0 %v2198
    %2978 = vmatprep.subr.bf16.mxu0 %v2205
    %2979 = vmatpush1.bf16.msra.mxu0 %v2204
    %2980 = vmatprep.subr.bf16.mxu0 %v2211
    %2981 = vmatpush1.bf16.msra.mxu0 %v2210
    %2982 = vmatprep.subr.bf16.mxu0 %v2217
    %2983 = vmatpush1.bf16.msra.mxu0 %v2216
    %2984 = vmatprep.subr.bf16.mxu0 %v2223
    %2985 = vmatpush1.bf16.msra.mxu0 %v2222
    %2986 = vmatprep.subr.bf16.mxu0 %v2229
    %2987 = vmatpush1.bf16.msra.mxu0 %v2228
    %2988 = vmatprep.mubr.bf16.mxu0 %v945
    %2989 = vmatmul.mubr.bf16.gmra.mrb[0].mxu0 %v944
    %v2990 = vpop.f32.mrb[0].mxu0
    %v2991 = vadd.f32 %v1259, %v2990
    %v2992 = vpop.f32.mrb[0].mxu0
    %v2993 = vadd.f32 %v1263, %v2992
    %v2994 = vpop.f32.mrb[0].mxu0
    %v2995 = vpop.f32.mrb[0].mxu0
    %2996 = vdwg.mxu0
    %2997 = vmatprep.subr.bf16.mxu0 %v2235
    %2998 = vmatpush1.bf16.msra.mxu0 %v2234
    %2999 = vmatprep.subr.bf16.mxu0 %v2241
    %3000 = vmatpush1.bf16.msra.mxu0 %v2240
    %3001 = vmatprep.subr.bf16.mxu0 %v2247
    %3002 = vmatpush1.bf16.msra.mxu0 %v2246
    %3003 = vmatprep.subr.bf16.mxu0 %v2253
    %3004 = vmatpush1.bf16.msra.mxu0 %v2252
    %3005 = vmatprep.subr.bf16.mxu0 %v2259
    %3006 = vmatpush1.bf16.msra.mxu0 %v2258
    %3007 = vmatprep.subr.bf16.mxu0 %v2265
    %3008 = vmatpush1.bf16.msra.mxu0 %v2264
    %3009 = vmatprep.subr.bf16.mxu0 %v2271
    %3010 = vmatpush1.bf16.msra.mxu0 %v2270
    %3011 = vmatprep.subr.bf16.mxu0 %v2277
    %3012 = vmatpush1.bf16.msra.mxu0 %v2276
    %3013 = vmatprep.subr.bf16.mxu0 %v2283
    %3014 = vmatpush1.bf16.msra.mxu0 %v2282
    %3015 = vmatprep.subr.bf16.mxu0 %v2289
    %3016 = vmatpush1.bf16.msra.mxu0 %v2288
    %3017 = vmatprep.subr.bf16.mxu0 %v2295
    %3018 = vmatpush1.bf16.msra.mxu0 %v2294
    %3019 = vmatprep.subr.bf16.mxu0 %v2301
    %3020 = vmatpush1.bf16.msra.mxu0 %v2300
    %3021 = vmatprep.subr.bf16.mxu0 %v2307
    %3022 = vmatpush1.bf16.msra.mxu0 %v2306
    %3023 = vmatprep.subr.bf16.mxu0 %v2313
    %3024 = vmatpush1.bf16.msra.mxu0 %v2312
    %3025 = vmatprep.subr.bf16.mxu0 %v2319
    %3026 = vmatpush1.bf16.msra.mxu0 %v2318
    %3027 = vmatprep.subr.bf16.mxu0 %v2325
    %3028 = vmatpush1.bf16.msra.mxu0 %v2324
    %3029 = vmatprep.mubr.bf16.mxu0 %v947
    %3030 = vmatmul.mubr.bf16.gmra.mrb[0].mxu0 %v946
    %v3031 = vpop.f32.mrb[0].mxu0
    %v3032 = vadd.f32 %v2991, %v3031
    %v3033 = vpop.f32.mrb[0].mxu0
    %v3034 = vadd.f32 %v2993, %v3033
    %v3035 = vpop.f32.mrb[0].mxu0
    %v3036 = vpop.f32.mrb[0].mxu0
    %3037 = vdwg.mxu0
    %3038 = vmatprep.subr.bf16.mxu0 %v2331
    %3039 = vmatpush1.bf16.msra.mxu0 %v2330
    %3040 = vmatprep.subr.bf16.mxu0 %v2337
    %3041 = vmatpush1.bf16.msra.mxu0 %v2336
    %3042 = vmatprep.subr.bf16.mxu0 %v2343
    %3043 = vmatpush1.bf16.msra.mxu0 %v2342
    %3044 = vmatprep.subr.bf16.mxu0 %v2349
    %3045 = vmatpush1.bf16.msra.mxu0 %v2348
    %3046 = vmatprep.subr.bf16.mxu0 %v2355
    %3047 = vmatpush1.bf16.msra.mxu0 %v2354
    %3048 = vmatprep.subr.bf16.mxu0 %v2361
    %3049 = vmatpush1.bf16.msra.mxu0 %v2360
    %3050 = vmatprep.subr.bf16.mxu0 %v2367
    %3051 = vmatpush1.bf16.msra.mxu0 %v2366
    %3052 = vmatprep.subr.bf16.mxu0 %v2373
    %3053 = vmatpush1.bf16.msra.mxu0 %v2372
    %3054 = vmatprep.subr.bf16.mxu0 %v2379
    %3055 = vmatpush1.bf16.msra.mxu0 %v2378
    %3056 = vmatprep.subr.bf16.mxu0 %v2385
    %3057 = vmatpush1.bf16.msra.mxu0 %v2384
    %3058 = vmatprep.subr.bf16.mxu0 %v2391
    %3059 = vmatpush1.bf16.msra.mxu0 %v2390
    %3060 = vmatprep.subr.bf16.mxu0 %v2397
    %3061 = vmatpush1.bf16.msra.mxu0 %v2396
    %3062 = vmatprep.subr.bf16.mxu0 %v2403
    %3063 = vmatpush1.bf16.msra.mxu0 %v2402
    %3064 = vmatprep.subr.bf16.mxu0 %v2409
    %3065 = vmatpush1.bf16.msra.mxu0 %v2408
    %3066 = vmatprep.subr.bf16.mxu0 %v2415
    %3067 = vmatpush1.bf16.msra.mxu0 %v2414
    %3068 = vmatprep.subr.bf16.mxu0 %v2421
    %3069 = vmatpush1.bf16.msra.mxu0 %v2420
    %3070 = vmatprep.mubr.bf16.mxu0 %v949
    %3071 = vmatmul.mubr.bf16.gmra.mrb[0].mxu0 %v948
    %v3072 = vpop.f32.mrb[0].mxu0
    %v3073 = vadd.f32 %v3032, %v3072
    %v3074 = vpop.f32.mrb[0].mxu0
    %v3075 = vadd.f32 %v3034, %v3074
    %v3076 = vpop.f32.mrb[0].mxu0
    %v3077 = vpop.f32.mrb[0].mxu0
    %3078 = vdwg.mxu0
    %v3079 = vtanh.pop %v2827
    %v3080 = vtanh.pop %v2829
    %v3081 = vtanh.pop %v2950
    %v3082 = vtanh.pop %v2952
    %v3083 = vtanh.pop %v3073
    %v3084 = vtanh.pop %v3075
    %v3085 = vpack.c.bf16 %v3079, %v3079
    %v3086 = vpack.c.bf16 %v3080, %v3080
    %v3087 = vpack.c.bf16 %v3081, %v3081
    %v3088 = vpack.c.bf16 %v3082, %v3082
    %v3089 = vpack.c.bf16 %v3083, %v3083
    %v3090 = vpack.c.bf16 %v3084, %v3084
    %v3091 = vld [vmem:[%s4] sm:$0xf]
    %v3092 = vld [vmem:[%s4 + $0x4] sm:$0xf]
    %v3093 = vld [vmem:[%s4 + $0x8] sm:$0xf]
    %v3094 = vld [vmem:[%s4 + $0xc] sm:$0xf]
    %v3095 = vld [vmem:[%s4 + $0x10] sm:$0xf]
    %v3096 = vld [vmem:[%s4 + $0x14] sm:$0xf]
    %v3097 = vld [vmem:[%s4 + $0x18] sm:$0xf]
    %v3098 = vld [vmem:[%s4 + $0x1c] sm:$0xf]
    %v3099 = vld [vmem:[%s4 + $0x20] sm:$0xf]
    %v3100 = vld [vmem:[%s4 + $0x24] sm:$0xf]
    %v3101 = vld [vmem:[%s4 + $0x28] sm:$0xf]
    %v3102 = vld [vmem:[%s4 + $0x2c] sm:$0xf]
    %v3103 = vld [vmem:[%s4 + $0x30] sm:$0xf]
    %v3104 = vld [vmem:[%s4 + $0x34] sm:$0xf]
    %v3105 = vld [vmem:[%s4 + $0x38] sm:$0xf]
    %v3106 = vld [vmem:[%s4 + $0x3c] sm:$0xf]
    %v3107 = vld [vmem:[%s4 + $0x40] sm:$0xf]
    %v3108 = vld [vmem:[%s4 + $0x44] sm:$0xf]
    %v3109 = vld [vmem:[%s4 + $0x48] sm:$0xf]
    %v3110 = vld [vmem:[%s4 + $0x4c] sm:$0xf]
    %v3111 = vld [vmem:[%s4 + $0x50] sm:$0xf]
    %v3112 = vld [vmem:[%s4 + $0x54] sm:$0xf]
    %v3113 = vld [vmem:[%s4 + $0x58] sm:$0xf]
    %v3114 = vld [vmem:[%s4 + $0x5c] sm:$0xf]
    %v3115 = vld [vmem:[%s4 + $0x60] sm:$0xf]
    %v3116 = vld [vmem:[%s4 + $0x64] sm:$0xf]
    %v3117 = vld [vmem:[%s4 + $0x68] sm:$0xf]
    %v3118 = vld [vmem:[%s4 + $0x6c] sm:$0xf]
    %v3119 = vld [vmem:[%s4 + $0x70] sm:$0xf]
    %v3120 = vld [vmem:[%s4 + $0x74] sm:$0xf]
    %v3121 = vld [vmem:[%s4 + $0x78] sm:$0xf]
    %v3122 = vld [vmem:[%s4 + $0x7c] sm:$0xf]
    %v3123 = vld [vmem:[%s4 + $0x80] sm:$0xf]
    %v3124 = vld [vmem:[%s4 + $0x84] sm:$0xf]
    %v3125 = vld [vmem:[%s4 + $0x88] sm:$0xf]
    %v3126 = vld [vmem:[%s4 + $0x8c] sm:$0xf]
    %v3127 = vld [vmem:[%s4 + $0x90] sm:$0xf]
    %v3128 = vld [vmem:[%s4 + $0x94] sm:$0xf]
    %v3129 = vld [vmem:[%s4 + $0x98] sm:$0xf]
    %v3130 = vld [vmem:[%s4 + $0x9c] sm:$0xf]
    %v3131 = vld [vmem:[%s4 + $0xa0] sm:$0xf]
    %v3132 = vld [vmem:[%s4 + $0xa4] sm:$0xf]
    %v3133 = vld [vmem:[%s4 + $0xa8] sm:$0xf]
    %v3134 = vld [vmem:[%s4 + $0xac] sm:$0xf]
    %v3135 = vld [vmem:[%s4 + $0xb0] sm:$0xf]
    %v3136 = vld [vmem:[%s4 + $0xb4] sm:$0xf]
    %v3137 = vld [vmem:[%s4 + $0xb8] sm:$0xf]
    %v3138 = vld [vmem:[%s4 + $0xbc] sm:$0xf]
    %v3139 = vld [vmem:[%s4 + $0xc0] sm:$0xf]
    %v3140 = vld [vmem:[%s4 + $0xc4] sm:$0xf]
    %v3141 = vld [vmem:[%s4 + $0xc8] sm:$0xf]
    %v3142 = vld [vmem:[%s4 + $0xcc] sm:$0xf]
    %v3143 = vld [vmem:[%s4 + $0xd0] sm:$0xf]
    %v3144 = vld [vmem:[%s4 + $0xd4] sm:$0xf]
    %v3145 = vld [vmem:[%s4 + $0xd8] sm:$0xf]
    %v3146 = vld [vmem:[%s4 + $0xdc] sm:$0xf]
    %v3147 = vld [vmem:[%s4 + $0xe0] sm:$0xf]
    %v3148 = vld [vmem:[%s4 + $0xe4] sm:$0xf]
    %v3149 = vld [vmem:[%s4 + $0xe8] sm:$0xf]
    %v3150 = vld [vmem:[%s4 + $0xec] sm:$0xf]
    %v3151 = vld [vmem:[%s4 + $0xf0] sm:$0xf]
    %v3152 = vld [vmem:[%s4 + $0xf4] sm:$0xf]
    %v3153 = vld [vmem:[%s4 + $0xf8] sm:$0xf]
    %v3154 = vld [vmem:[%s4 + $0xfc] sm:$0xf]
    %v3155 = vld [vmem:[%s4 + $0x100] sm:$0xf]
    %v3156 = vld [vmem:[%s4 + $0x104] sm:$0xf]
    %v3157 = vld [vmem:[%s4 + $0x108] sm:$0xf]
    %v3158 = vld [vmem:[%s4 + $0x10c] sm:$0xf]
    %v3159 = vld [vmem:[%s4 + $0x110] sm:$0xf]
    %v3160 = vld [vmem:[%s4 + $0x114] sm:$0xf]
    %v3161 = vld [vmem:[%s4 + $0x118] sm:$0xf]
    %v3162 = vld [vmem:[%s4 + $0x11c] sm:$0xf]
    %v3163 = vld [vmem:[%s4 + $0x120] sm:$0xf]
    %v3164 = vld [vmem:[%s4 + $0x124] sm:$0xf]
    %v3165 = vld [vmem:[%s4 + $0x128] sm:$0xf]
    %v3166 = vld [vmem:[%s4 + $0x12c] sm:$0xf]
    %v3167 = vld [vmem:[%s4 + $0x130] sm:$0xf]
    %v3168 = vld [vmem:[%s4 + $0x134] sm:$0xf]
    %v3169 = vld [vmem:[%s4 + $0x138] sm:$0xf]
    %v3170 = vld [vmem:[%s4 + $0x13c] sm:$0xf]
    %v3171 = vld [vmem:[%s4 + $0x140] sm:$0xf]
    %v3172 = vld [vmem:[%s4 + $0x144] sm:$0xf]
    %v3173 = vld [vmem:[%s4 + $0x148] sm:$0xf]
    %v3174 = vld [vmem:[%s4 + $0x14c] sm:$0xf]
    %v3175 = vld [vmem:[%s4 + $0x150] sm:$0xf]
    %v3176 = vld [vmem:[%s4 + $0x154] sm:$0xf]
    %v3177 = vld [vmem:[%s4 + $0x158] sm:$0xf]
    %v3178 = vld [vmem:[%s4 + $0x15c] sm:$0xf]
    %v3179 = vld [vmem:[%s4 + $0x160] sm:$0xf]
    %v3180 = vld [vmem:[%s4 + $0x164] sm:$0xf]
    %v3181 = vld [vmem:[%s4 + $0x168] sm:$0xf]
    %v3182 = vld [vmem:[%s4 + $0x16c] sm:$0xf]
    %v3183 = vld [vmem:[%s4 + $0x170] sm:$0xf]
    %v3184 = vld [vmem:[%s4 + $0x174] sm:$0xf]
    %v3185 = vld [vmem:[%s4 + $0x178] sm:$0xf]
    %v3186 = vld [vmem:[%s4 + $0x17c] sm:$0xf]
    %v3187 = vld [vmem:[%s5] sm:$0x1]
    %v3189 = vlaneseq
    %v3190 = vshrl.u32 %v3189, 7
    %v3191 = vsub.s32 0, %v3190
    %v3192 = vrot.slane %v3187, %v3191
    %v3290 = vunpack.c.l.b16 %v3091
    %v3291 = vunpack.c.l.b16 %v3092
    %v3292 = vunpack.c.l.b16 %v3093
    %v3293 = vunpack.c.l.b16 %v3094
    %v3294 = vunpack.c.l.b16 %v3095
    %v3295 = vunpack.c.l.b16 %v3096
    %v3296 = vunpack.c.l.b16 %v3097
    %v3297 = vunpack.c.l.b16 %v3098
    %v3298 = vunpack.c.l.b16 %v3099
    %v3299 = vunpack.c.l.b16 %v3100
    %v3300 = vunpack.c.l.b16 %v3101
    %v3301 = vunpack.c.l.b16 %v3102
    %v3302 = vunpack.c.l.b16 %v3103
    %v3303 = vunpack.c.l.b16 %v3104
    %v3304 = vunpack.c.l.b16 %v3105
    %v3305 = vunpack.c.l.b16 %v3106
    %v3306 = vunpack.c.l.b16 %v3107
    %v3307 = vunpack.c.l.b16 %v3108
    %v3308 = vunpack.c.l.b16 %v3109
    %v3309 = vunpack.c.l.b16 %v3110
    %v3310 = vunpack.c.l.b16 %v3111
    %v3311 = vunpack.c.l.b16 %v3112
    %v3312 = vunpack.c.l.b16 %v3113
    %v3313 = vunpack.c.l.b16 %v3114
    %v3314 = vunpack.c.l.b16 %v3115
    %v3315 = vunpack.c.l.b16 %v3116
    %v3316 = vunpack.c.l.b16 %v3117
    %v3317 = vunpack.c.l.b16 %v3118
    %v3318 = vunpack.c.l.b16 %v3119
    %v3319 = vunpack.c.l.b16 %v3120
    %v3320 = vunpack.c.l.b16 %v3121
    %v3321 = vunpack.c.l.b16 %v3122
    %v3322 = vunpack.c.l.b16 %v3123
    %v3323 = vunpack.c.l.b16 %v3124
    %v3324 = vunpack.c.l.b16 %v3125
    %v3325 = vunpack.c.l.b16 %v3126
    %v3326 = vunpack.c.l.b16 %v3127
    %v3327 = vunpack.c.l.b16 %v3128
    %v3328 = vunpack.c.l.b16 %v3129
    %v3329 = vunpack.c.l.b16 %v3130
    %v3330 = vunpack.c.l.b16 %v3131
    %v3331 = vunpack.c.l.b16 %v3132
    %v3332 = vunpack.c.l.b16 %v3133
    %v3333 = vunpack.c.l.b16 %v3134
    %v3334 = vunpack.c.l.b16 %v3135
    %v3335 = vunpack.c.l.b16 %v3136
    %v3336 = vunpack.c.l.b16 %v3137
    %v3337 = vunpack.c.l.b16 %v3138
    %v3338 = vunpack.c.l.b16 %v3139
    %v3339 = vunpack.c.l.b16 %v3140
    %v3340 = vunpack.c.l.b16 %v3141
    %v3341 = vunpack.c.l.b16 %v3142
    %v3342 = vunpack.c.l.b16 %v3143
    %v3343 = vunpack.c.l.b16 %v3144
    %v3344 = vunpack.c.l.b16 %v3145
    %v3345 = vunpack.c.l.b16 %v3146
    %v3346 = vunpack.c.l.b16 %v3147
    %v3347 = vunpack.c.l.b16 %v3148
    %v3348 = vunpack.c.l.b16 %v3149
    %v3349 = vunpack.c.l.b16 %v3150
    %v3350 = vunpack.c.l.b16 %v3151
    %v3351 = vunpack.c.l.b16 %v3152
    %v3352 = vunpack.c.l.b16 %v3153
    %v3353 = vunpack.c.l.b16 %v3154
    %v3354 = vunpack.c.l.b16 %v3155
    %v3355 = vunpack.c.l.b16 %v3156
    %v3356 = vunpack.c.l.b16 %v3157
    %v3357 = vunpack.c.l.b16 %v3158
    %v3358 = vunpack.c.l.b16 %v3159
    %v3359 = vunpack.c.l.b16 %v3160
    %v3360 = vunpack.c.l.b16 %v3161
    %v3361 = vunpack.c.l.b16 %v3162
    %v3362 = vunpack.c.l.b16 %v3163
    %v3363 = vunpack.c.l.b16 %v3164
    %v3364 = vunpack.c.l.b16 %v3165
    %v3365 = vunpack.c.l.b16 %v3166
    %v3366 = vunpack.c.l.b16 %v3167
    %v3367 = vunpack.c.l.b16 %v3168
    %v3368 = vunpack.c.l.b16 %v3169
    %v3369 = vunpack.c.l.b16 %v3170
    %v3370 = vunpack.c.l.b16 %v3171
    %v3371 = vunpack.c.l.b16 %v3172
    %v3372 = vunpack.c.l.b16 %v3173
    %v3373 = vunpack.c.l.b16 %v3174
    %v3374 = vunpack.c.l.b16 %v3175
    %v3375 = vunpack.c.l.b16 %v3176
    %v3376 = vunpack.c.l.b16 %v3177
    %v3377 = vunpack.c.l.b16 %v3178
    %v3378 = vunpack.c.l.b16 %v3179
    %v3379 = vunpack.c.l.b16 %v3180
    %v3380 = vunpack.c.l.b16 %v3181
    %v3381 = vunpack.c.l.b16 %v3182
    %v3382 = vunpack.c.l.b16 %v3183
    %v3383 = vunpack.c.l.b16 %v3184
    %v3384 = vunpack.c.l.b16 %v3185
    %v3385 = vunpack.c.l.b16 %v3186
    %v3386 = vpack.c.b16 %v3291, %v3290
    %v3387 = vpack.c.b16 %v3293, %v3292
    %v3388 = vpack.c.b16 %v3295, %v3294
    %v3389 = vpack.c.b16 %v3297, %v3296
    %v3390 = vpack.c.b16 %v3299, %v3298
    %v3391 = vpack.c.b16 %v3301, %v3300
    %v3392 = vpack.c.b16 %v3303, %v3302
    %v3393 = vpack.c.b16 %v3305, %v3304
    %v3394 = vpack.c.b16 %v3307, %v3306
    %v3395 = vpack.c.b16 %v3309, %v3308
    %v3396 = vpack.c.b16 %v3311, %v3310
    %v3397 = vpack.c.b16 %v3313, %v3312
    %v3398 = vpack.c.b16 %v3315, %v3314
    %v3399 = vpack.c.b16 %v3317, %v3316
    %v3400 = vpack.c.b16 %v3319, %v3318
    %v3401 = vpack.c.b16 %v3321, %v3320
    %v3402 = vpack.c.b16 %v3323, %v3322
    %v3403 = vpack.c.b16 %v3325, %v3324
    %v3404 = vpack.c.b16 %v3327, %v3326
    %v3405 = vpack.c.b16 %v3329, %v3328
    %v3406 = vpack.c.b16 %v3331, %v3330
    %v3407 = vpack.c.b16 %v3333, %v3332
    %v3408 = vpack.c.b16 %v3335, %v3334
    %v3409 = vpack.c.b16 %v3337, %v3336
    %v3410 = vpack.c.b16 %v3339, %v3338
    %v3411 = vpack.c.b16 %v3341, %v3340
    %v3412 = vpack.c.b16 %v3343, %v3342
    %v3413 = vpack.c.b16 %v3345, %v3344
    %v3414 = vpack.c.b16 %v3347, %v3346
    %v3415 = vpack.c.b16 %v3349, %v3348
    %v3416 = vpack.c.b16 %v3351, %v3350
    %v3417 = vpack.c.b16 %v3353, %v3352
    %v3418 = vpack.c.b16 %v3355, %v3354
    %v3419 = vpack.c.b16 %v3357, %v3356
    %v3420 = vpack.c.b16 %v3359, %v3358
    %v3421 = vpack.c.b16 %v3361, %v3360
    %v3422 = vpack.c.b16 %v3363, %v3362
    %v3423 = vpack.c.b16 %v3365, %v3364
    %v3424 = vpack.c.b16 %v3367, %v3366
    %v3425 = vpack.c.b16 %v3369, %v3368
    %v3426 = vpack.c.b16 %v3371, %v3370
    %v3427 = vpack.c.b16 %v3373, %v3372
    %v3428 = vpack.c.b16 %v3375, %v3374
    %v3429 = vpack.c.b16 %v3377, %v3376
    %v3430 = vpack.c.b16 %v3379, %v3378
    %v3431 = vpack.c.b16 %v3381, %v3380
    %v3432 = vpack.c.b16 %v3383, %v3382
    %v3433 = vpack.c.b16 %v3385, %v3384
    %3482 = vmatprep.subr.bf16.mxu0 0
    %3483 = vmatpush1.bf16.msra.mxu0 %v3386
    %3484 = vmatprep.subr.bf16.mxu0 0
    %3485 = vmatpush1.bf16.msra.mxu0 %v3387
    %3486 = vmatprep.subr.bf16.mxu0 0
    %3487 = vmatpush1.bf16.msra.mxu0 %v3388
    %3488 = vmatprep.subr.bf16.mxu0 0
    %3489 = vmatpush1.bf16.msra.mxu0 %v3389
    %3490 = vmatprep.subr.bf16.mxu0 0
    %3491 = vmatpush1.bf16.msra.mxu0 %v3390
    %3492 = vmatprep.subr.bf16.mxu0 0
    %3493 = vmatpush1.bf16.msra.mxu0 %v3391
    %3494 = vmatprep.subr.bf16.mxu0 0
    %3495 = vmatpush1.bf16.msra.mxu0 %v3392
    %3496 = vmatprep.subr.bf16.mxu0 0
    %3497 = vmatpush1.bf16.msra.mxu0 %v3393
    %3498 = vmatprep.subr.bf16.mxu0 0
    %3499 = vmatpush1.bf16.msra.mxu0 %v3394
    %3500 = vmatprep.subr.bf16.mxu0 0
    %3501 = vmatpush1.bf16.msra.mxu0 %v3395
    %3502 = vmatprep.subr.bf16.mxu0 0
    %3503 = vmatpush1.bf16.msra.mxu0 %v3396
    %3504 = vmatprep.subr.bf16.mxu0 0
    %3505 = vmatpush1.bf16.msra.mxu0 %v3397
    %3506 = vmatprep.subr.bf16.mxu0 0
    %3507 = vmatpush1.bf16.msra.mxu0 %v3398
    %3508 = vmatprep.subr.bf16.mxu0 0
    %3509 = vmatpush1.bf16.msra.mxu0 %v3399
    %3510 = vmatprep.subr.bf16.mxu0 0
    %3511 = vmatpush1.bf16.msra.mxu0 %v3400
    %3512 = vmatprep.subr.bf16.mxu0 0
    %3513 = vmatpush1.bf16.msra.mxu0 %v3401
    %3514 = vmatprep.mubr.bf16.mxu0 %v3086
    %3515 = vmatmul.mubr.bf16.gmra.mrb[0].mxu0 %v3085
    %v3516 = vpop.f32.mrb[0].mxu0
    %v3517 = vadd.f32 %v3192, %v3516
    %v3518 = vpop.f32.mrb[0].mxu0
    %v3519 = vpop.f32.mrb[0].mxu0
    %v3520 = vpop.f32.mrb[0].mxu0
    %3521 = vdwg.mxu0
    %3522 = vmatprep.subr.bf16.mxu0 0
    %3523 = vmatpush1.bf16.msra.mxu0 %v3402
    %3524 = vmatprep.subr.bf16.mxu0 0
    %3525 = vmatpush1.bf16.msra.mxu0 %v3403
    %3526 = vmatprep.subr.bf16.mxu0 0
    %3527 = vmatpush1.bf16.msra.mxu0 %v3404
    %3528 = vmatprep.subr.bf16.mxu0 0
    %3529 = vmatpush1.bf16.msra.mxu0 %v3405
    %3530 = vmatprep.subr.bf16.mxu0 0
    %3531 = vmatpush1.bf16.msra.mxu0 %v3406
    %3532 = vmatprep.subr.bf16.mxu0 0
    %3533 = vmatpush1.bf16.msra.mxu0 %v3407
    %3534 = vmatprep.subr.bf16.mxu0 0
    %3535 = vmatpush1.bf16.msra.mxu0 %v3408
    %3536 = vmatprep.subr.bf16.mxu0 0
    %3537 = vmatpush1.bf16.msra.mxu0 %v3409
    %3538 = vmatprep.subr.bf16.mxu0 0
    %3539 = vmatpush1.bf16.msra.mxu0 %v3410
    %3540 = vmatprep.subr.bf16.mxu0 0
    %3541 = vmatpush1.bf16.msra.mxu0 %v3411
    %3542 = vmatprep.subr.bf16.mxu0 0
    %3543 = vmatpush1.bf16.msra.mxu0 %v3412
    %3544 = vmatprep.subr.bf16.mxu0 0
    %3545 = vmatpush1.bf16.msra.mxu0 %v3413
    %3546 = vmatprep.subr.bf16.mxu0 0
    %3547 = vmatpush1.bf16.msra.mxu0 %v3414
    %3548 = vmatprep.subr.bf16.mxu0 0
    %3549 = vmatpush1.bf16.msra.mxu0 %v3415
    %3550 = vmatprep.subr.bf16.mxu0 0
    %3551 = vmatpush1.bf16.msra.mxu0 %v3416
    %3552 = vmatprep.subr.bf16.mxu0 0
    %3553 = vmatpush1.bf16.msra.mxu0 %v3417
    %3554 = vmatprep.mubr.bf16.mxu0 %v3088
    %3555 = vmatmul.mubr.bf16.gmra.mrb[0].mxu0 %v3087
    %v3556 = vpop.f32.mrb[0].mxu0
    %v3557 = vadd.f32 %v3517, %v3556
    %v3558 = vpop.f32.mrb[0].mxu0
    %v3559 = vpop.f32.mrb[0].mxu0
    %v3560 = vpop.f32.mrb[0].mxu0
    %3561 = vdwg.mxu0
    %3562 = vmatprep.subr.bf16.mxu0 0
    %3563 = vmatpush1.bf16.msra.mxu0 %v3418
    %3564 = vmatprep.subr.bf16.mxu0 0
    %3565 = vmatpush1.bf16.msra.mxu0 %v3419
    %3566 = vmatprep.subr.bf16.mxu0 0
    %3567 = vmatpush1.bf16.msra.mxu0 %v3420
    %3568 = vmatprep.subr.bf16.mxu0 0
    %3569 = vmatpush1.bf16.msra.mxu0 %v3421
    %3570 = vmatprep.subr.bf16.mxu0 0
    %3571 = vmatpush1.bf16.msra.mxu0 %v3422
    %3572 = vmatprep.subr.bf16.mxu0 0
    %3573 = vmatpush1.bf16.msra.mxu0 %v3423
    %3574 = vmatprep.subr.bf16.mxu0 0
    %3575 = vmatpush1.bf16.msra.mxu0 %v3424
    %3576 = vmatprep.subr.bf16.mxu0 0
    %3577 = vmatpush1.bf16.msra.mxu0 %v3425
    %3578 = vmatprep.subr.bf16.mxu0 0
    %3579 = vmatpush1.bf16.msra.mxu0 %v3426
    %3580 = vmatprep.subr.bf16.mxu0 0
    %3581 = vmatpush1.bf16.msra.mxu0 %v3427
    %3582 = vmatprep.subr.bf16.mxu0 0
    %3583 = vmatpush1.bf16.msra.mxu0 %v3428
    %3584 = vmatprep.subr.bf16.mxu0 0
    %3585 = vmatpush1.bf16.msra.mxu0 %v3429
    %3586 = vmatprep.subr.bf16.mxu0 0
    %3587 = vmatpush1.bf16.msra.mxu0 %v3430
    %3588 = vmatprep.subr.bf16.mxu0 0
    %3589 = vmatpush1.bf16.msra.mxu0 %v3431
    %3590 = vmatprep.subr.bf16.mxu0 0
    %3591 = vmatpush1.bf16.msra.mxu0 %v3432
    %3592 = vmatprep.subr.bf16.mxu0 0
    %3593 = vmatpush1.bf16.msra.mxu0 %v3433
    %3594 = vmatprep.mubr.bf16.mxu0 %v3090
    %3595 = vmatmul.mubr.bf16.gmra.mrb[0].mxu0 %v3089
    %v3596 = vpop.f32.mrb[0].mxu0
    %v3597 = vadd.f32 %v3557, %v3596
    %v3598 = vpop.f32.mrb[0].mxu0
    %v3599 = vpop.f32.mrb[0].mxu0
    %v3600 = vpop.f32.mrb[0].mxu0
    %3601 = vdwg.mxu0
    %3602 = vst [vmem:[%s6] sm:$0xff] %v3597
  $region33: #{sentiment_net_forward.1} parent=0 // pred_fallthru
    _
  // Predicated region
  $region34: #{sentiment_net_forward.1} parent=0 // pred_check
    _
  $region35: #{sentiment_net_forward.1} parent=0 // pred_check_branch
    %3604 = sbr.rel (0) target = $region37
  $region36: #{sentiment_net_forward.1} parent=0 // pred_region
    _
  $region37: #{sentiment_net_forward.1} parent=0 // pred_fallthru
    _
  // Predicated region
  $region38: #{sentiment_net_forward.1} parent=0 // pred_check
    _
  $region39: #{sentiment_net_forward.1} parent=0 // pred_check_branch
    %3606 = sbr.rel (0) target = $region41
  $region40: #{sentiment_net_forward.1} parent=0 // pred_region
    _
  $region41: #{sentiment_net_forward.1} parent=0 // pred_fallthru
    _

</llo_original>
